<compile_context>
chip_gen: v7x
topology: tpu7x:2x2x1
jax: 0.10.0
libtpu: 0.0.40
codegen_flags: <defaults>
</compile_context>

<pallas_src>
import functools

import jax
import jax.numpy as jnp
from jax import lax
from jax.experimental import pallas as pl
from jax.experimental.pallas import tpu as pltpu


def _round_up(x, m):
    return ((x + m - 1) // m) * m


def _pad_to(a, shape):
    return jnp.pad(a, [(0, t - s) for s, t in zip(a.shape, shape)])


# ---------------------------------------------------------------------------
# Fused Pallas kernel:
#   stem conv (im2col matmul, K=27 unpadded) + ReLU6
#   + 1x1 conv to 1280 ch (Cf-chunked) + ReLU6
#   + unmasked global-sum-pool accumulation into an (8, Cf) f32 accumulator
# ---------------------------------------------------------------------------

def _encoder_pool_kernel(cols_ref, sw_ref, sb_ref, pw_ref, pb_ref,
                         o_ref, acc_ref, *, tr, cfc, bf16_epilogue):
    """Grid = (split s [parallel], batch b [parallel], row-tile r [arbitrary]).

    cols_ref: (1, tr, K)   bf16  im2col patches (K = 27, unpadded in HBM)
    sw_ref:   (K, Cs)      bf16  stem conv weight (Cs padded to 128)
    sb_ref:   (1, Cs)      f32   stem bias
    pw_ref:   (Cs, Cf)     bf16  1x1 conv weight
    pb_ref:   (1, Cf)      f32   1x1 conv bias
    o_ref:    (1,1,1,Cf)   f32   pooled SUM for this (split, batch)
    acc_ref:  (8, Cf)      f32   sublane-aligned pooled-sum accumulator
    """
    r = pl.program_id(2)

    @pl.when(r == 0)
    def _init():
        acc_ref[...] = jnp.zeros_like(acc_ref)

    # Stem 3x3/s2 conv as an im2col matmul (small K=27 contraction handled by
    # Mosaic); f32 accumulate, f32 bias + ReLU6 epilogue on the small Cs tile.
    x = cols_ref[0]                                           # (tr, K) bf16
    h = jnp.dot(x, sw_ref[...], preferred_element_type=jnp.float32)
    h = jnp.clip(h + sb_ref[...], 0.0, 6.0)                   # (tr, Cs) f32
    hb = h.astype(jnp.bfloat16)

    cs, cf = pw_ref.shape
    n_chunks = cf // cfc

    # Pointwise 1x1 conv + ReLU6 + partial-sum accumulate, chunked along Cf so
    # the live f32 intermediate stays small (matmul-pop -> epilogue -> acc fuse
    # per chunk, no (tr, 1280) f32 slab). Static unrolled loop, static slices.
    for ci in range(n_chunks):
        c0 = ci * cfc
        w = pw_ref[:, c0:c0 + cfc]                            # (Cs, cfc) bf16
        y = jnp.dot(hb, w, preferred_element_type=jnp.float32)  # (tr, cfc) f32
        b = pb_ref[:, c0:c0 + cfc]                            # (1, cfc) f32
        if bf16_epilogue:
            # Enable on v6e / v7x only (packed bf16 VALU); v5e has no bf16 VPU.
            yq = jnp.clip(y.astype(jnp.bfloat16) + b.astype(jnp.bfloat16),
                          0.0, 6.0).astype(jnp.float32)
        else:
            yq = jnp.clip(y + b, 0.0, 6.0)
        # Sublane-aligned partial sums: collapse groups of 8 rows only (pure
        # VALU adds, no cross-sublane reduce, no masked 1-sublane store).
        part = yq.reshape(tr // 8, 8, cfc).sum(axis=0)        # (8, cfc) f32
        acc_ref[:, c0:c0 + cfc] += part

    @pl.when(r == pl.num_programs(2) - 1)
    def _finalize():
        # Single cross-sublane collapse per (split, batch); raw pooled SUM out.
        o_ref[...] = jnp.sum(acc_ref[...], axis=0,
                             keepdims=True).reshape(o_ref.shape)


def _vmem_limit_bytes(tr, k, cs, cf, cfc):
    working = (
        2 * tr * k * 2          # cols block, double-buffered (bf16)
        + 2 * k * cs * 2        # stem weight
        + 2 * cs * cf * 2       # pointwise weight
        + 2 * (cs + cf) * 4     # biases
        + 8 * cf * 4            # pooled-sum accumulator
        + 2 * cf * 4            # output block
        + tr * cs * (4 + 2)     # h (f32) + hb (bf16)
        + tr * cfc * 4          # per-chunk f32 intermediate
    )
    # Generous headroom for compiler temporaries, but well under v7x's 64 MiB.
    return int(min(32 * 1024 * 1024, max(16 * 1024 * 1024, 4 * working)))


def _fused_encoder_pool(cols, sw, sb, pw, pb, *, tr, n_splits,
                        bf16_epilogue=False):
    n, hw_pad, k = cols.shape
    cs, cf = pw.shape
    cfc = 256 if cf % 256 == 0 else cf          # Cf chunk width
    r_steps = hw_pad // (n_splits * tr)
    grid = (n_splits, n, r_steps)

    kernel = functools.partial(_encoder_pool_kernel, tr=tr, cfc=cfc,
                               bf16_epilogue=bf16_epilogue)

    flops = 2 * n * hw_pad * (k * cs + cs * cf)
    bytes_accessed = (n * hw_pad * k * 2 + (k * cs + cs * cf) * 2
                      + (cs + cf) * 4 + n_splits * n * cf * 4)

    return pl.pallas_call(
        kernel,
        out_shape=jax.ShapeDtypeStruct((n_splits, n, 1, cf), jnp.float32),
        grid=grid,
        in_specs=[
            pl.BlockSpec((1, tr, k), lambda s, b, r: (b, s * r_steps + r, 0)),
            pl.BlockSpec((k, cs), lambda s, b, r: (0, 0)),
            pl.BlockSpec((1, cs), lambda s, b, r: (0, 0)),
            pl.BlockSpec((cs, cf), lambda s, b, r: (0, 0)),
            pl.BlockSpec((1, cf), lambda s, b, r: (0, 0)),
        ],
        out_specs=pl.BlockSpec((1, 1, 1, cf), lambda s, b, r: (s, b, 0, 0)),
        scratch_shapes=[pltpu.VMEM((8, cf), jnp.float32)],
        compiler_params=pltpu.CompilerParams(
            dimension_semantics=("parallel", "parallel", "arbitrary"),
            vmem_limit_bytes=_vmem_limit_bytes(tr, k, cs, cf, cfc),
        ),
        cost_estimate=pl.CostEstimate(
            flops=flops, transcendentals=0, bytes_accessed=bytes_accessed),
    )(cols, sw, sb, pw, pb)


# ---------------------------------------------------------------------------
# Glue (plain JAX): im2col as a single XLA conv with an identity kernel.
# ---------------------------------------------------------------------------

def _extract_patches(x_nhwc, kh, kw, stride, pad):
    """im2col for the stem conv: one XLA conv, feature f = (i*kw + j)*Cin + c."""
    cin = x_nhwc.shape[-1]
    feat = kh * kw * cin
    patch_kernel = jnp.eye(feat, dtype=x_nhwc.dtype).reshape(kh, kw, cin, feat)
    return lax.conv_general_dilated(
        x_nhwc, patch_kernel,
        window_strides=(stride, stride),
        padding=((pad, pad), (pad, pad)),
        dimension_numbers=("NHWC", "HWIO", "NHWC"))


# ---------------------------------------------------------------------------
# RoofCNN forward (mobilenet_v2 path)
# ---------------------------------------------------------------------------

def init_params(key, num_classes, in_ch=3, stem_ch=32, feat_ch=1280):
    k1, k2, k3, k4, k5, k6 = jax.random.split(key, 6)
    return {
        # stem: 3x3 s2 conv, stored as (kh*kw*Cin, Cout) for im2col matmul,
        # row ordering matches _extract_patches (f = (i*3 + j)*Cin + c).
        "stem_w": jax.random.normal(k1, (3 * 3 * in_ch, stem_ch), jnp.float32) * 0.1,
        "stem_b": jax.random.normal(k2, (stem_ch,), jnp.float32) * 0.01,
        # pointwise 1x1 conv to 1280 channels (MobileNetV2 head conv)
        "pw_w": jax.random.normal(k3, (stem_ch, feat_ch), jnp.float32) * 0.1,
        "pw_b": jax.random.normal(k4, (feat_ch,), jnp.float32) * 0.01,
        # classifier Linear(1280, num_classes)
        "cls_w": jax.random.normal(k5, (feat_ch, num_classes), jnp.float32) * 0.05,
        "cls_b": jax.random.normal(k6, (num_classes,), jnp.float32) * 0.01,
    }


@jax.jit
def roof_cnn_forward(params, x_nchw):
    # NCHW (PyTorch convention) -> NHWC (TPU-friendly, channels on lanes).
    x = jnp.transpose(x_nchw, (0, 2, 3, 1)).astype(jnp.float32)
    n = x.shape[0]

    cols = _extract_patches(x, kh=3, kw=3, stride=2, pad=1)   # (N, Ho, Wo, 27)
    _, ho, wo, k = cols.shape
    hw = ho * wo

    # Tiling choices.
    #  - split the spatial range across 2 "virtual batches" when N is odd so
    #    both v7x TensorCores stay busy at batch-1 inference;
    #  - tr: large spatial row tile (multiple of 16 for bf16 sublane packing);
    #    512 keeps the working set small even on v7x's 64 MiB VMEM
    #    (sweep 512-1024 on v5e/v6e if desired).
    n_splits = 2 if (n % 2 == 1) else 1
    tr = min(512, _round_up(hw, 16))
    hw_pad = _round_up(hw, n_splits * tr)

    cols = cols.reshape(n, hw, k)
    if hw_pad != hw:
        cols = jnp.pad(cols, ((0, 0), (0, hw_pad - hw), (0, 0)))
    cols = cols.astype(jnp.bfloat16)          # K stays 27 in HBM (no 128 pad)

    cs = _round_up(params["stem_w"].shape[1], 128)   # 32 -> 128 (lane-dense h)
    cf = params["pw_w"].shape[1]                      # 1280

    sw = _pad_to(params["stem_w"], (k, cs)).astype(jnp.bfloat16)
    sb = _pad_to(params["stem_b"][None, :], (1, cs)).astype(jnp.float32)
    pw = _pad_to(params["pw_w"], (cs, cf)).astype(jnp.bfloat16)
    pb = params["pw_b"][None, :].astype(jnp.float32)

    pooled_parts = _fused_encoder_pool(cols, sw, sb, pw, pb,
                                       tr=tr, n_splits=n_splits)
    pooled_sum = pooled_parts.sum(axis=(0, 2))                 # (N, Cf)

    # Padded spatial rows (all-zero patches) each contributed the constant
    # clip(clip(sb)@pw + pb, 0, 6); subtract it once instead of masking in the
    # kernel's inner loop.
    n_pad = hw_pad - hw
    if n_pad:
        h_pad = jnp.clip(sb, 0.0, 6.0).astype(jnp.bfloat16)          # (1, Cs)
        y_pad = jnp.clip(jnp.dot(h_pad, pw,
                                 preferred_element_type=jnp.float32) + pb,
                         0.0, 6.0)                                   # (1, Cf)
        pooled_sum = pooled_sum - n_pad * y_pad
    pooled = pooled_sum / hw            # adaptive_avg_pool2d((1,1)) + flatten

    # Classifier hoisted to XLA: batched (N,1280)x(1280,C) has a far better
    # MXU shape than an in-kernel M=1 matmul per image.
    cw = params["cls_w"].astype(jnp.bfloat16)
    logits = jnp.dot(pooled.astype(jnp.bfloat16), cw,
                     preferred_element_type=jnp.float32) + params["cls_b"]
    return logits


def reference_forward(params, x_nchw):
    """Plain-JAX reference with the same bf16-operand / f32-accumulate math."""
    x = jnp.transpose(x_nchw, (0, 2, 3, 1)).astype(jnp.float32)
    cols = _extract_patches(x, kh=3, kw=3, stride=2, pad=1)
    n, ho, wo, k = cols.shape
    cols = cols.reshape(n, ho * wo, k).astype(jnp.bfloat16)
    sw = params["stem_w"].astype(jnp.bfloat16)
    pw = params["pw_w"].astype(jnp.bfloat16)
    cw = params["cls_w"].astype(jnp.bfloat16)
    h = jnp.clip(jnp.matmul(cols, sw, preferred_element_type=jnp.float32)
                 + params["stem_b"], 0.0, 6.0)
    y = jnp.clip(jnp.matmul(h.astype(jnp.bfloat16), pw,
                            preferred_element_type=jnp.float32)
                 + params["pw_b"], 0.0, 6.0)
    pooled = jnp.mean(y, axis=1)
    return (jnp.matmul(pooled.astype(jnp.bfloat16), cw,
                       preferred_element_type=jnp.float32) + params["cls_b"])


if __name__ == "__main__":
    num_classes = 4
    key = jax.random.PRNGKey(0)
    k_params, k_x1, k_x2 = jax.random.split(key, 3)

    params = init_params(k_params, num_classes)

    # Small RGB image batch, NCHW like the PyTorch module expects.
    x1 = jax.random.normal(k_x1, (2, 3, 16, 16), jnp.float32)
    logits1 = roof_cnn_forward(params, x1)
    jax.block_until_ready(logits1)
    assert logits1.shape == (2, num_classes), logits1.shape
    assert logits1.dtype == jnp.float32
    ref1 = reference_forward(params, x1)
    assert jnp.allclose(logits1, ref1, rtol=2e-2, atol=2e-2), (logits1, ref1)

    # Batch-1 / odd spatial size: exercises the dual-core spatial split and
    # the padded-row correction path.
    x2 = jax.random.normal(k_x2, (1, 3, 18, 18), jnp.float32)
    logits2 = roof_cnn_forward(params, x2)
    jax.block_until_ready(logits2)
    assert logits2.shape == (1, num_classes), logits2.shape
    ref2 = reference_forward(params, x2)
    assert jnp.allclose(logits2, ref2, rtol=2e-2, atol=2e-2), (logits2, ref2)

    print("KERNEL_OK")
</pallas_src>

<mosaic_0001>
module attributes {stable_mosaic.version = 11 : i64} {
  func.func @_encoder_pool_kernel(%arg0: i32, %arg1: i32, %arg2: i32, %arg3: memref<1x64x27xbf16, #tpu.memory_space<vmem>>, %arg4: memref<27x128xbf16, #tpu.memory_space<vmem>>, %arg5: memref<1x128xf32, #tpu.memory_space<vmem>>, %arg6: memref<128x1280xbf16, #tpu.memory_space<vmem>>, %arg7: memref<1x1280xf32, #tpu.memory_space<vmem>>, %arg8: memref<1x1x1x1280xf32, #tpu.memory_space<vmem>>, %arg9: memref<8x1280xf32, #tpu.memory_space<vmem>>) attributes {dimension_semantics = [#tpu.dimension_semantics<parallel>, #tpu.dimension_semantics<parallel>, #tpu.dimension_semantics<arbitrary>], iteration_bounds = array<i64: 1, 2, 1>, scalar_prefetch = 0 : i64, scratch_operands = 1 : i64, tpu.core_type = #tpu.core_type<tc>, window_params = [{transform_indices = @transform_0, window_bounds = array<i64: 1, 64, 27>}, {pipeline_mode = #tpu.pipeline_mode<synchronous>, transform_indices = @transform_1, window_bounds = array<i64: 27, 128>}, {pipeline_mode = #tpu.pipeline_mode<synchronous>, transform_indices = @transform_2, window_bounds = array<i64: 1, 128>}, {pipeline_mode = #tpu.pipeline_mode<synchronous>, transform_indices = @transform_3, window_bounds = array<i64: 128, 1280>}, {pipeline_mode = #tpu.pipeline_mode<synchronous>, transform_indices = @transform_4, window_bounds = array<i64: 1, 1280>}, {transform_indices = @transform_5, window_bounds = array<i64: 1, 1, 1, 1280>}]} {
    %c0_i32 = arith.constant 0 : i32
    %0 = arith.cmpi eq, %arg2, %c0_i32 : i32
    %1 = arith.extui %0 : i1 to i32
    %c0_i32_0 = arith.constant 0 : i32
    %2 = arith.cmpi ne, %1, %c0_i32_0 : i32
    scf.if %2 {
      %cst_67 = arith.constant 0.000000e+00 : f32
      %88 = vector.broadcast %cst_67 : f32 to vector<8x1280xf32>
      %c0_68 = arith.constant 0 : index
      %c0_69 = arith.constant 0 : index
      %89 = vector.load %arg9[%c0_68, %c0_69] : memref<8x1280xf32, #tpu.memory_space<vmem>>, vector<8x1280xf32>
      tpu.vector_store %arg9[%c0_68, %c0_69], %88 {strides = array<i32>} : memref<8x1280xf32, #tpu.memory_space<vmem>>, vector<8x1280xf32>,
    } else {
    }
    %c0 = arith.constant 0 : index
    %c0_1 = arith.constant 0 : index
    %c0_2 = arith.constant 0 : index
    %3 = vector.load %arg3[%c0, %c0_1, %c0_2] : memref<1x64x27xbf16, #tpu.memory_space<vmem>>, vector<1x64x27xbf16>
    %4 = vector.shape_cast %3 : vector<1x64x27xbf16> to vector<64x27xbf16>
    %c0_3 = arith.constant 0 : index
    %c0_4 = arith.constant 0 : index
    %5 = vector.load %arg4[%c0_3, %c0_4] : memref<27x128xbf16, #tpu.memory_space<vmem>>, vector<27x128xbf16>
    %cst = arith.constant dense<0.000000e+00> : vector<64x128xf32>
    %6 = tpu.matmul %4, %5, %cst {dimension_numbers = #tpu.dot_dimension_numbers<[1], [0], [0], [1], [0, 0, 1, 1], [], []>} : vector<64x27xbf16>, vector<27x128xbf16>, vector<64x128xf32> -> vector<64x128xf32>
    %c0_5 = arith.constant 0 : index
    %c0_6 = arith.constant 0 : index
    %7 = vector.load %arg5[%c0_5, %c0_6] : memref<1x128xf32, #tpu.memory_space<vmem>>, vector<1x128xf32>
    %8 = vector.broadcast %7 : vector<1x128xf32> to vector<64x128xf32>
    %9 = arith.addf %6, %8 : vector<64x128xf32>
    %cst_7 = arith.constant 0.000000e+00 : f32
    %cst_8 = arith.constant 6.000000e+00 : f32
    %10 = vector.broadcast %cst_7 : f32 to vector<64x128xf32>
    %11 = arith.maximumf %10, %9 : vector<64x128xf32>
    %12 = vector.broadcast %cst_8 : f32 to vector<64x128xf32>
    %13 = arith.minimumf %12, %11 : vector<64x128xf32>
    %14 = arith.truncf %13 : vector<64x128xf32> to vector<64x128xbf16>
    %c0_9 = arith.constant 0 : index
    %c0_10 = arith.constant 0 : index
    %15 = vector.load %arg6[%c0_9, %c0_10] : memref<128x1280xbf16, #tpu.memory_space<vmem>>, vector<128x256xbf16>
    %cst_11 = arith.constant dense<0.000000e+00> : vector<64x256xf32>
    %16 = tpu.matmul %14, %15, %cst_11 {dimension_numbers = #tpu.dot_dimension_numbers<[1], [0], [0], [1], [0, 0, 1, 1], [], []>} : vector<64x128xbf16>, vector<128x256xbf16>, vector<64x256xf32> -> vector<64x256xf32>
    %c0_12 = arith.constant 0 : index
    %c0_13 = arith.constant 0 : index
    %17 = vector.load %arg7[%c0_12, %c0_13] : memref<1x1280xf32, #tpu.memory_space<vmem>>, vector<1x256xf32>
    %18 = vector.broadcast %17 : vector<1x256xf32> to vector<64x256xf32>
    %19 = arith.addf %16, %18 : vector<64x256xf32>
    %cst_14 = arith.constant 0.000000e+00 : f32
    %cst_15 = arith.constant 6.000000e+00 : f32
    %20 = vector.broadcast %cst_14 : f32 to vector<64x256xf32>
    %21 = arith.maximumf %20, %19 : vector<64x256xf32>
    %22 = vector.broadcast %cst_15 : f32 to vector<64x256xf32>
    %23 = arith.minimumf %22, %21 : vector<64x256xf32>
    %24 = vector.shape_cast %23 : vector<64x256xf32> to vector<8x8x256xf32>
    %cst_16 = arith.constant dense<0.000000e+00> : vector<8x256xf32>
    %25 = vector.multi_reduction <add>, %24, %cst_16 [0] : vector<8x8x256xf32> to vector<8x256xf32>
    %c0_17 = arith.constant 0 : index
    %c0_18 = arith.constant 0 : index
    %26 = vector.load %arg9[%c0_17, %c0_18] : memref<8x1280xf32, #tpu.memory_space<vmem>>, vector<8x256xf32>
    %27 = arith.addf %26, %25 : vector<8x256xf32>
    %c0_19 = arith.constant 0 : index
    %c0_20 = arith.constant 0 : index
    %28 = vector.load %arg9[%c0_19, %c0_20] : memref<8x1280xf32, #tpu.memory_space<vmem>>, vector<8x256xf32>
    tpu.vector_store %arg9[%c0_19, %c0_20], %27 {strides = array<i32>} : memref<8x1280xf32, #tpu.memory_space<vmem>>, vector<8x256xf32>,
    %c0_21 = arith.constant 0 : index
    %c256 = arith.constant 256 : index
    %29 = vector.load %arg6[%c0_21, %c256] : memref<128x1280xbf16, #tpu.memory_space<vmem>>, vector<128x256xbf16>
    %cst_22 = arith.constant dense<0.000000e+00> : vector<64x256xf32>
    %30 = tpu.matmul %14, %29, %cst_22 {dimension_numbers = #tpu.dot_dimension_numbers<[1], [0], [0], [1], [0, 0, 1, 1], [], []>} : vector<64x128xbf16>, vector<128x256xbf16>, vector<64x256xf32> -> vector<64x256xf32>
    %c0_23 = arith.constant 0 : index
    %c256_24 = arith.constant 256 : index
    %31 = vector.load %arg7[%c0_23, %c256_24] : memref<1x1280xf32, #tpu.memory_space<vmem>>, vector<1x256xf32>
    %32 = vector.broadcast %31 : vector<1x256xf32> to vector<64x256xf32>
    %33 = arith.addf %30, %32 : vector<64x256xf32>
    %cst_25 = arith.constant 0.000000e+00 : f32
    %cst_26 = arith.constant 6.000000e+00 : f32
    %34 = vector.broadcast %cst_25 : f32 to vector<64x256xf32>
    %35 = arith.maximumf %34, %33 : vector<64x256xf32>
    %36 = vector.broadcast %cst_26 : f32 to vector<64x256xf32>
    %37 = arith.minimumf %36, %35 : vector<64x256xf32>
    %38 = vector.shape_cast %37 : vector<64x256xf32> to vector<8x8x256xf32>
    %cst_27 = arith.constant dense<0.000000e+00> : vector<8x256xf32>
    %39 = vector.multi_reduction <add>, %38, %cst_27 [0] : vector<8x8x256xf32> to vector<8x256xf32>
    %c0_28 = arith.constant 0 : index
    %c256_29 = arith.constant 256 : index
    %40 = vector.load %arg9[%c0_28, %c256_29] : memref<8x1280xf32, #tpu.memory_space<vmem>>, vector<8x256xf32>
    %41 = arith.addf %40, %39 : vector<8x256xf32>
    %c0_30 = arith.constant 0 : index
    %c256_31 = arith.constant 256 : index
    %42 = vector.load %arg9[%c0_30, %c256_31] : memref<8x1280xf32, #tpu.memory_space<vmem>>, vector<8x256xf32>
    tpu.vector_store %arg9[%c0_30, %c256_31], %41 {strides = array<i32>} : memref<8x1280xf32, #tpu.memory_space<vmem>>, vector<8x256xf32>,
    %c0_32 = arith.constant 0 : index
    %c512 = arith.constant 512 : index
    %43 = vector.load %arg6[%c0_32, %c512] : memref<128x1280xbf16, #tpu.memory_space<vmem>>, vector<128x256xbf16>
    %cst_33 = arith.constant dense<0.000000e+00> : vector<64x256xf32>
    %44 = tpu.matmul %14, %43, %cst_33 {dimension_numbers = #tpu.dot_dimension_numbers<[1], [0], [0], [1], [0, 0, 1, 1], [], []>} : vector<64x128xbf16>, vector<128x256xbf16>, vector<64x256xf32> -> vector<64x256xf32>
    %c0_34 = arith.constant 0 : index
    %c512_35 = arith.constant 512 : index
    %45 = vector.load %arg7[%c0_34, %c512_35] : memref<1x1280xf32, #tpu.memory_space<vmem>>, vector<1x256xf32>
    %46 = vector.broadcast %45 : vector<1x256xf32> to vector<64x256xf32>
    %47 = arith.addf %44, %46 : vector<64x256xf32>
    %cst_36 = arith.constant 0.000000e+00 : f32
    %cst_37 = arith.constant 6.000000e+00 : f32
    %48 = vector.broadcast %cst_36 : f32 to vector<64x256xf32>
    %49 = arith.maximumf %48, %47 : vector<64x256xf32>
    %50 = vector.broadcast %cst_37 : f32 to vector<64x256xf32>
    %51 = arith.minimumf %50, %49 : vector<64x256xf32>
    %52 = vector.shape_cast %51 : vector<64x256xf32> to vector<8x8x256xf32>
    %cst_38 = arith.constant dense<0.000000e+00> : vector<8x256xf32>
    %53 = vector.multi_reduction <add>, %52, %cst_38 [0] : vector<8x8x256xf32> to vector<8x256xf32>
    %c0_39 = arith.constant 0 : index
    %c512_40 = arith.constant 512 : index
    %54 = vector.load %arg9[%c0_39, %c512_40] : memref<8x1280xf32, #tpu.memory_space<vmem>>, vector<8x256xf32>
    %55 = arith.addf %54, %53 : vector<8x256xf32>
    %c0_41 = arith.constant 0 : index
    %c512_42 = arith.constant 512 : index
    %56 = vector.load %arg9[%c0_41, %c512_42] : memref<8x1280xf32, #tpu.memory_space<vmem>>, vector<8x256xf32>
    tpu.vector_store %arg9[%c0_41, %c512_42], %55 {strides = array<i32>} : memref<8x1280xf32, #tpu.memory_space<vmem>>, vector<8x256xf32>,
    %c0_43 = arith.constant 0 : index
    %c768 = arith.constant 768 : index
    %57 = vector.load %arg6[%c0_43, %c768] : memref<128x1280xbf16, #tpu.memory_space<vmem>>, vector<128x256xbf16>
    %cst_44 = arith.constant dense<0.000000e+00> : vector<64x256xf32>
    %58 = tpu.matmul %14, %57, %cst_44 {dimension_numbers = #tpu.dot_dimension_numbers<[1], [0], [0], [1], [0, 0, 1, 1], [], []>} : vector<64x128xbf16>, vector<128x256xbf16>, vector<64x256xf32> -> vector<64x256xf32>
    %c0_45 = arith.constant 0 : index
    %c768_46 = arith.constant 768 : index
    %59 = vector.load %arg7[%c0_45, %c768_46] : memref<1x1280xf32, #tpu.memory_space<vmem>>, vector<1x256xf32>
    %60 = vector.broadcast %59 : vector<1x256xf32> to vector<64x256xf32>
    %61 = arith.addf %58, %60 : vector<64x256xf32>
    %cst_47 = arith.constant 0.000000e+00 : f32
    %cst_48 = arith.constant 6.000000e+00 : f32
    %62 = vector.broadcast %cst_47 : f32 to vector<64x256xf32>
    %63 = arith.maximumf %62, %61 : vector<64x256xf32>
    %64 = vector.broadcast %cst_48 : f32 to vector<64x256xf32>
    %65 = arith.minimumf %64, %63 : vector<64x256xf32>
    %66 = vector.shape_cast %65 : vector<64x256xf32> to vector<8x8x256xf32>
    %cst_49 = arith.constant dense<0.000000e+00> : vector<8x256xf32>
    %67 = vector.multi_reduction <add>, %66, %cst_49 [0] : vector<8x8x256xf32> to vector<8x256xf32>
    %c0_50 = arith.constant 0 : index
    %c768_51 = arith.constant 768 : index
    %68 = vector.load %arg9[%c0_50, %c768_51] : memref<8x1280xf32, #tpu.memory_space<vmem>>, vector<8x256xf32>
    %69 = arith.addf %68, %67 : vector<8x256xf32>
    %c0_52 = arith.constant 0 : index
    %c768_53 = arith.constant 768 : index
    %70 = vector.load %arg9[%c0_52, %c768_53] : memref<8x1280xf32, #tpu.memory_space<vmem>>, vector<8x256xf32>
    tpu.vector_store %arg9[%c0_52, %c768_53], %69 {strides = array<i32>} : memref<8x1280xf32, #tpu.memory_space<vmem>>, vector<8x256xf32>,
    %c0_54 = arith.constant 0 : index
    %c1024 = arith.constant 1024 : index
    %71 = vector.load %arg6[%c0_54, %c1024] : memref<128x1280xbf16, #tpu.memory_space<vmem>>, vector<128x256xbf16>
    %cst_55 = arith.constant dense<0.000000e+00> : vector<64x256xf32>
    %72 = tpu.matmul %14, %71, %cst_55 {dimension_numbers = #tpu.dot_dimension_numbers<[1], [0], [0], [1], [0, 0, 1, 1], [], []>} : vector<64x128xbf16>, vector<128x256xbf16>, vector<64x256xf32> -> vector<64x256xf32>
    %c0_56 = arith.constant 0 : index
    %c1024_57 = arith.constant 1024 : index
    %73 = vector.load %arg7[%c0_56, %c1024_57] : memref<1x1280xf32, #tpu.memory_space<vmem>>, vector<1x256xf32>
    %74 = vector.broadcast %73 : vector<1x256xf32> to vector<64x256xf32>
    %75 = arith.addf %72, %74 : vector<64x256xf32>
    %cst_58 = arith.constant 0.000000e+00 : f32
    %cst_59 = arith.constant 6.000000e+00 : f32
    %76 = vector.broadcast %cst_58 : f32 to vector<64x256xf32>
    %77 = arith.maximumf %76, %75 : vector<64x256xf32>
    %78 = vector.broadcast %cst_59 : f32 to vector<64x256xf32>
    %79 = arith.minimumf %78, %77 : vector<64x256xf32>
    %80 = vector.shape_cast %79 : vector<64x256xf32> to vector<8x8x256xf32>
    %cst_60 = arith.constant dense<0.000000e+00> : vector<8x256xf32>
    %81 = vector.multi_reduction <add>, %80, %cst_60 [0] : vector<8x8x256xf32> to vector<8x256xf32>
    %c0_61 = arith.constant 0 : index
    %c1024_62 = arith.constant 1024 : index
    %82 = vector.load %arg9[%c0_61, %c1024_62] : memref<8x1280xf32, #tpu.memory_space<vmem>>, vector<8x256xf32>
    %83 = arith.addf %82, %81 : vector<8x256xf32>
    %c0_63 = arith.constant 0 : index
    %c1024_64 = arith.constant 1024 : index
    %84 = vector.load %arg9[%c0_63, %c1024_64] : memref<8x1280xf32, #tpu.memory_space<vmem>>, vector<8x256xf32>
    tpu.vector_store %arg9[%c0_63, %c1024_64], %83 {strides = array<i32>} : memref<8x1280xf32, #tpu.memory_space<vmem>>, vector<8x256xf32>,
    %c0_i32_65 = arith.constant 0 : i32
    %85 = arith.cmpi eq, %arg2, %c0_i32_65 : i32
    %86 = arith.extui %85 : i1 to i32
    %c0_i32_66 = arith.constant 0 : i32
    %87 = arith.cmpi ne, %86, %c0_i32_66 : i32
    scf.if %87 {
      %c0_67 = arith.constant 0 : index
      %c0_68 = arith.constant 0 : index
      %88 = vector.load %arg9[%c0_67, %c0_68] : memref<8x1280xf32, #tpu.memory_space<vmem>>, vector<8x1280xf32>
      %cst_69 = arith.constant dense<0.000000e+00> : vector<1280xf32>
      %89 = vector.multi_reduction <add>, %88, %cst_69 [0] : vector<8x1280xf32> to vector<1280xf32>
      %90 = vector.shape_cast %89 : vector<1280xf32> to vector<1x1280xf32>
      %91 = vector.shape_cast %90 : vector<1x1280xf32> to vector<1x1x1x1280xf32>
      %c0_70 = arith.constant 0 : index
      %c0_71 = arith.constant 0 : index
      %c0_72 = arith.constant 0 : index
      %c0_73 = arith.constant 0 : index
      %92 = vector.load %arg8[%c0_70, %c0_71, %c0_72, %c0_73] : memref<1x1x1x1280xf32, #tpu.memory_space<vmem>>, vector<1x1x1x1280xf32>
      tpu.vector_store %arg8[%c0_70, %c0_71, %c0_72, %c0_73], %91 {strides = array<i32>} : memref<1x1x1x1280xf32, #tpu.memory_space<vmem>>, vector<1x1x1x1280xf32>,
    } else {
    }
    return
  }
  func.func @transform_0(%arg0: i32, %arg1: i32, %arg2: i32) -> (i32, i32, i32) {
    %c1_i32 = arith.constant 1 : i32
    %0 = arith.muli %arg0, %c1_i32 : i32
    %1 = arith.addi %0, %arg2 : i32
    %c0_i32 = arith.constant 0 : i32
    %c0_i32_0 = arith.constant 0 : i32
    return %arg1, %1, %c0_i32 : i32, i32, i32
  }
  func.func @transform_1(%arg0: i32, %arg1: i32, %arg2: i32) -> (i32, i32) {
    %c0_i32 = arith.constant 0 : i32
    %c0_i32_0 = arith.constant 0 : i32
    %c0_i32_1 = arith.constant 0 : i32
    return %c0_i32, %c0_i32_0 : i32, i32
  }
  func.func @transform_2(%arg0: i32, %arg1: i32, %arg2: i32) -> (i32, i32) {
    %c0_i32 = arith.constant 0 : i32
    %c0_i32_0 = arith.constant 0 : i32
    %c0_i32_1 = arith.constant 0 : i32
    return %c0_i32, %c0_i32_0 : i32, i32
  }
  func.func @transform_3(%arg0: i32, %arg1: i32, %arg2: i32) -> (i32, i32) {
    %c0_i32 = arith.constant 0 : i32
    %c0_i32_0 = arith.constant 0 : i32
    %c0_i32_1 = arith.constant 0 : i32
    return %c0_i32, %c0_i32_0 : i32, i32
  }
  func.func @transform_4(%arg0: i32, %arg1: i32, %arg2: i32) -> (i32, i32) {
    %c0_i32 = arith.constant 0 : i32
    %c0_i32_0 = arith.constant 0 : i32
    %c0_i32_1 = arith.constant 0 : i32
    return %c0_i32, %c0_i32_0 : i32, i32
  }
  func.func @transform_5(%arg0: i32, %arg1: i32, %arg2: i32) -> (i32, i32, i32, i32) {
    %c0_i32 = arith.constant 0 : i32
    %c0_i32_0 = arith.constant 0 : i32
    %c0_i32_1 = arith.constant 0 : i32
    return %arg0, %arg1, %c0_i32, %c0_i32_0 : i32, i32, i32, i32
  }
}

</mosaic_0001>

<llo_original>
// kernel: roof_cnn_forward.1
$region0: #{roof_cnn_forward.1}
  #allocation0 [shape = 'u32[]', space=smem, size = 0x4, offset = 0x4, fixed_abs, tag = 'smem constant byte address 0x4 - core index']
  #allocation1 [shape = 'u32[144,128]{1,0:T(1,128)}', space=vmem, size = 0x12000, scoped, tag = 'internal scratch']
  #allocation2 [shape = 'f32[8,1280]{1,0:T(8,128)}', space=vmem, size = 0xa000, scoped, tag = 'scratch operand']
  %s0 = inlined_call_operand.vmem [shape: bf16[2,64,27], index: 0, kind: input, shape index: {}]
  %s1 = inlined_call_operand.vmem [shape: bf16[27,128], index: 1, kind: input, shape index: {}]
  %s2 = inlined_call_operand.vmem [shape: f32[1,128], index: 2, kind: input, shape index: {}]
  %s3 = inlined_call_operand.vmem [shape: bf16[128,1280], index: 3, kind: input, shape index: {}]
  %s4 = inlined_call_operand.vmem [shape: f32[1,1280], index: 4, kind: input, shape index: {}]
  %s5 = inlined_call_operand.vmem [shape: f32[1,2,1,1280], index: 5, kind: output, shape index: {}]
  %s6 = sld [smem:[#allocation0]]
  $region61: #{roof_cnn_forward.1} parent=0
    _
  %s8 = ssub.s32 1, %s6
  %s9 = scalar_select 0, %s8, %s6
  loop: start=0, step=1, limit=4
  $region2: #{roof_cnn_forward.1} parent=0 // loop_pre_header
    _
  $region3: #{roof_cnn_forward.1} parent=0 // loop_header
    %s11 = sphi 0, %s15
    %p12 = scmp.ge.s32.totalorder %s11, 4
    %s18 = sphi 0, %s37
    %s19 = sphi 0, %s33
    %s20 = sphi 0, %s29
    %s21 = sphi 0, %s18
    %s22 = sphi 0, %s19
    %s23 = sphi 0, %s20
    %s24 = sphi 0, %s21
    %s25 = sphi 0, %s22
    %s26 = sphi 0, %s23
    %s44 = sphi 0, %s46
    %s47 = sphi 0, %s44
    %s48 = sphi 0, %s47
    %s64 = sphi 0, %s48
    %s68 = sphi 0, %s68
    %s70 = sphi 0, %s68
    %s71 = sphi 0, %s70
    %s85 = sphi 0, %s71
    %s89 = sphi 0, %s89
    %s91 = sphi 0, %s89
    %s92 = sphi 0, %s91
    %s106 = sphi 0, %s92
    %s110 = sphi 0, %s110
    %s112 = sphi 0, %s110
    %s113 = sphi 0, %s112
    %s127 = sphi 0, %s113
    %s131 = sphi 0, %s131
    %s133 = sphi 0, %s131
    %s134 = sphi 0, %s133
    %s148 = sphi 0, %s134
    %s156 = sphi 0, %s158
    %s159 = sphi 0, %s156
    %s160 = sphi 0, %s159
    %s176 = sphi 0, %s160
  $region4: #{roof_cnn_forward.1} parent=0 // loop_header_branch
    %14 = sbr.rel (%p12) target = $region8
  $region5: #{roof_cnn_forward.1} parent=0 // loop_body
    %s16 = ssub.s32 %s11, 1
    %s17 = ssub.s32 %s11, 2
    %s27 = sadd.s32 1, %s20
    %p28 = scmp.ge.s32.totalorder %s27, 1
    %s29 = scalar_select %p28, 0, %s27
    %s30 = sadd.s32 1, %s19
    %s31 = scalar_select %p28, %s30, %s19
    %p32 = scmp.ge.s32.totalorder %s31, 2
    %s33 = scalar_select %p32, 0, %s31
    %s34 = sadd.s32 1, %s18
    %s35 = scalar_select %p32, %s34, %s18
    %p36 = scmp.ge.s32.totalorder %s35, 1
    %s37 = scalar_select %p36, 0, %s35
    %s38 = sadd.s32 %s18, %s20
    %s39 = sadd.s32 %s37, %s29
    %s40 = ssub.s32 %s19, %s33
    %s41 = ssub.s32 %s38, %s39
    %s42 = sor.u32 %s40, %s41
    %p43 = scmp.eq.s32.totalorder %s42, 0
    %s45 = sadd.s32 %s44, 1
    %s46 = scalar_select %p43, %s44, %s45
    %p49 = pneg %p43
    %p50 = scmp.eq.s32.totalorder %s11, 1
    %p51 = por %p49, %p50
    %p52 = scmp.ne.s32.totalorder %s44, %s47
    %p53 = scmp.eq.s32.totalorder %s11, 0
    %p54 = por %p52, %p53
    %p55 = scmp.ne.s32.totalorder %s44, %s47
    %p56 = scmp.eq.s32.totalorder %s16, 1
    %p57 = por %p55, %p56
    %p58 = scmp.ne.s32.totalorder %s47, %s48
    %p59 = scmp.eq.s32.totalorder %s16, 0
    %p60 = por %p58, %p59
    %p61 = scmp.ne.s32.totalorder %s47, %s48
    %p62 = scmp.eq.s32.totalorder %s17, 1
    %p63 = por %p61, %p62
    %p65 = scmp.ne.s32.totalorder %s48, %s64
    %p66 = scmp.eq.s32.totalorder %s17, 0
    %p67 = por %p65, %p66
    %s69 = sadd.s32 %s68, 1
    %p72 = scmp.eq.s32.totalorder %s11, 1
    %p73 = scmp.ne.s32.totalorder %s68, %s70
    %p74 = scmp.eq.s32.totalorder %s11, 0
    %p75 = por %p73, %p74
    %p76 = scmp.ne.s32.totalorder %s68, %s70
    %p77 = scmp.eq.s32.totalorder %s16, 1
    %p78 = por %p76, %p77
    %p79 = scmp.ne.s32.totalorder %s70, %s71
    %p80 = scmp.eq.s32.totalorder %s16, 0
    %p81 = por %p79, %p80
    %p82 = scmp.ne.s32.totalorder %s70, %s71
    %p83 = scmp.eq.s32.totalorder %s17, 1
    %p84 = por %p82, %p83
    %p86 = scmp.ne.s32.totalorder %s71, %s85
    %p87 = scmp.eq.s32.totalorder %s17, 0
    %p88 = por %p86, %p87
    %s90 = sadd.s32 %s89, 1
    %p93 = scmp.eq.s32.totalorder %s11, 1
    %p94 = scmp.ne.s32.totalorder %s89, %s91
    %p95 = scmp.eq.s32.totalorder %s11, 0
    %p96 = por %p94, %p95
    %p97 = scmp.ne.s32.totalorder %s89, %s91
    %p98 = scmp.eq.s32.totalorder %s16, 1
    %p99 = por %p97, %p98
    %p100 = scmp.ne.s32.totalorder %s91, %s92
    %p101 = scmp.eq.s32.totalorder %s16, 0
    %p102 = por %p100, %p101
    %p103 = scmp.ne.s32.totalorder %s91, %s92
    %p104 = scmp.eq.s32.totalorder %s17, 1
    %p105 = por %p103, %p104
    %p107 = scmp.ne.s32.totalorder %s92, %s106
    %p108 = scmp.eq.s32.totalorder %s17, 0
    %p109 = por %p107, %p108
    %s111 = sadd.s32 %s110, 1
    %p114 = scmp.eq.s32.totalorder %s11, 1
    %p115 = scmp.ne.s32.totalorder %s110, %s112
    %p116 = scmp.eq.s32.totalorder %s11, 0
    %p117 = por %p115, %p116
    %p118 = scmp.ne.s32.totalorder %s110, %s112
    %p119 = scmp.eq.s32.totalorder %s16, 1
    %p120 = por %p118, %p119
    %p121 = scmp.ne.s32.totalorder %s112, %s113
    %p122 = scmp.eq.s32.totalorder %s16, 0
    %p123 = por %p121, %p122
    %p124 = scmp.ne.s32.totalorder %s112, %s113
    %p125 = scmp.eq.s32.totalorder %s17, 1
    %p126 = por %p124, %p125
    %p128 = scmp.ne.s32.totalorder %s113, %s127
    %p129 = scmp.eq.s32.totalorder %s17, 0
    %p130 = por %p128, %p129
    %s132 = sadd.s32 %s131, 1
    %p135 = scmp.eq.s32.totalorder %s11, 1
    %p136 = scmp.ne.s32.totalorder %s131, %s133
    %p137 = scmp.eq.s32.totalorder %s11, 0
    %p138 = por %p136, %p137
    %p139 = scmp.ne.s32.totalorder %s131, %s133
    %p140 = scmp.eq.s32.totalorder %s16, 1
    %p141 = por %p139, %p140
    %p142 = scmp.ne.s32.totalorder %s133, %s134
    %p143 = scmp.eq.s32.totalorder %s16, 0
    %p144 = por %p142, %p143
    %p145 = scmp.ne.s32.totalorder %s133, %s134
    %p146 = scmp.eq.s32.totalorder %s17, 1
    %p147 = por %p145, %p146
    %p149 = scmp.ne.s32.totalorder %s134, %s148
    %p150 = scmp.eq.s32.totalorder %s17, 0
    %p151 = por %p149, %p150
    %s152 = ssub.s32 %s18, %s37
    %s153 = ssub.s32 %s19, %s33
    %s154 = sor.u32 %s152, %s153
    %p155 = scmp.eq.s32.totalorder %s154, 0
    %s157 = sadd.s32 %s156, 1
    %s158 = scalar_select %p155, %s156, %s157
    %p161 = pneg %p155
    %p162 = scmp.eq.s32.totalorder %s11, 1
    %p163 = por %p161, %p162
    %p164 = scmp.ne.s32.totalorder %s156, %s159
    %p165 = scmp.eq.s32.totalorder %s11, 0
    %p166 = por %p164, %p165
    %p167 = scmp.ne.s32.totalorder %s156, %s159
    %p168 = scmp.eq.s32.totalorder %s16, 1
    %p169 = por %p167, %p168
    %p170 = scmp.ne.s32.totalorder %s159, %s160
    %p171 = scmp.eq.s32.totalorder %s16, 0
    %p172 = por %p170, %p171
    %p173 = scmp.ne.s32.totalorder %s159, %s160
    %p174 = scmp.eq.s32.totalorder %s17, 1
    %p175 = por %p173, %p174
    %p177 = scmp.ne.s32.totalorder %s160, %s176
    %p178 = scmp.eq.s32.totalorder %s17, 0
    %p179 = por %p177, %p178
    %p180 = scmp.le.s32.totalorder 1, %s11
    %p181 = scmp.lt.s32.totalorder %s11, 3
    %p182 = pnand %p180, %p181
    %p183 = pneg %p182
    // Predicated region
    $region9: #{roof_cnn_forward.1} parent=5 // pred_check
      _
    $region10: #{roof_cnn_forward.1} parent=5 // pred_check_branch
      %185 = sbr.rel (%p182) target = $region12
    $region11: #{roof_cnn_forward.1} parent=5 // pred_region
      %s186 = ssub.s32 %s11, 1
      // Predicated region
      $region13: #{roof_cnn_forward.1} parent=11 // pred_check
        %p187 = pneg %p81
      $region14: #{roof_cnn_forward.1} parent=11 // pred_check_branch
        %189 = sbr.rel (%p187) target = $region16
      $region15: #{roof_cnn_forward.1} parent=11 // pred_region
        _
      $region16: #{roof_cnn_forward.1} parent=11 // pred_fallthru
        _
      // Predicated region
      $region17: #{roof_cnn_forward.1} parent=11 // pred_check
        %p190 = pneg %p102
      $region18: #{roof_cnn_forward.1} parent=11 // pred_check_branch
        %192 = sbr.rel (%p190) target = $region20
      $region19: #{roof_cnn_forward.1} parent=11 // pred_region
        _
      $region20: #{roof_cnn_forward.1} parent=11 // pred_fallthru
        _
      // Predicated region
      $region21: #{roof_cnn_forward.1} parent=11 // pred_check
        %p193 = pneg %p123
      $region22: #{roof_cnn_forward.1} parent=11 // pred_check_branch
        %195 = sbr.rel (%p193) target = $region24
      $region23: #{roof_cnn_forward.1} parent=11 // pred_region
        _
      $region24: #{roof_cnn_forward.1} parent=11 // pred_fallthru
        _
      // Predicated region
      $region25: #{roof_cnn_forward.1} parent=11 // pred_check
        %p196 = pneg %p144
      $region26: #{roof_cnn_forward.1} parent=11 // pred_check_branch
        %198 = sbr.rel (%p196) target = $region28
      $region27: #{roof_cnn_forward.1} parent=11 // pred_region
        _
      $region28: #{roof_cnn_forward.1} parent=11 // pred_fallthru
        _
    $region12: #{roof_cnn_forward.1} parent=5 // pred_fallthru
      _
    %p199 = scmp.lt.s32.totalorder %s11, 2
    // Predicated region
    $region29: #{roof_cnn_forward.1} parent=5 // pred_check
      %p200 = pneg %p199
    $region30: #{roof_cnn_forward.1} parent=5 // pred_check_branch
      %202 = sbr.rel (%p200) target = $region32
    $region31: #{roof_cnn_forward.1} parent=5 // pred_region
      // Predicated region
      $region33: #{roof_cnn_forward.1} parent=31 // pred_check
        %p203 = pneg %p54
      $region34: #{roof_cnn_forward.1} parent=31 // pred_check_branch
        %205 = sbr.rel (%p203) target = $region36
      $region35: #{roof_cnn_forward.1} parent=31 // pred_region
        %s206 = sadd.s32 %s18, %s20
        %s207 = smul.u32 8, %s206
        %p208 = scmp.lt.s32.totalorder %s19, 1
        %s209 = scalar_select %p208, %s19, 1
        %p210 = scmp.lt.s32.totalorder %s207, 7
        %s211 = scalar_select %p210, %s207, 7
        %s212 = smul.addr %s209, 8
        %s213 = sadd.s32 %s211, %s212
        %s214 = smul.addr %s213, 4
        %s215 = scalar_lea.vmem %s0, %s214
        %s216 = sadd.s32 %s18, %s20
        %s217 = smul.u32 8, %s216
      $region36: #{roof_cnn_forward.1} parent=31 // pred_fallthru
        _
    $region32: #{roof_cnn_forward.1} parent=5 // pred_fallthru
      _
    %p218 = scmp.le.s32.totalorder 1, %s11
    %p219 = scmp.lt.s32.totalorder %s11, 3
    %p220 = pnand %p218, %p219
    %p221 = pneg %p220
    // Predicated region
    $region37: #{roof_cnn_forward.1} parent=5 // pred_check
      _
    $region38: #{roof_cnn_forward.1} parent=5 // pred_check_branch
      %223 = sbr.rel (%p220) target = $region40
    $region39: #{roof_cnn_forward.1} parent=5 // pred_region
      %s224 = ssub.s32 %s11, 1
      %s225 = sadd.s32 %s21, %s23
      %s226 = smul.u32 8, %s225
      %p227 = scmp.lt.s32.totalorder %s22, 1
      %s228 = scalar_select %p227, %s22, 1
      %p229 = scmp.lt.s32.totalorder %s226, 7
      %s230 = scalar_select %p229, %s226, 7
      %s231 = smul.addr %s228, 8
      %s232 = sadd.s32 %s230, %s231
      %s233 = smul.addr %s232, 4
      %s234 = scalar_lea.vmem %s0, %s233
      %p235 = pneg %p60
      %p236 = pneg %p57
      %p237 = pneg %p81
      %p238 = pneg %p78
      %p239 = pneg %p102
      %p240 = pneg %p99
      %p241 = pneg %p123
      %p242 = pneg %p120
      %p243 = pneg %p144
      %p244 = pneg %p141
      %p245 = pneg %p172
      %p246 = pneg %p169
      %p247 = scmp.lt.s32.totalorder %s21, 0
      %s248 = scalar_select %p247, %s21, 0
      %p249 = scmp.lt.s32.totalorder %s22, 1
      %s250 = scalar_select %p249, %s22, 1
      %s251 = smul.addr %s250, 10
      %s252 = smul.addr %s248, 20
      %s253 = sadd.s32 %s251, %s252
      %s254 = scalar_lea.vmem %s5, %s253
      %s255 = sadd.s32 %s21, %s23
      %s256 = smul.u32 8, %s255
      %p257 = scmp.lt.s32.totalorder %s22, 1
      %s258 = scalar_select %p257, %s22, 1
      %p259 = scmp.lt.s32.totalorder %s256, 7
      %s260 = scalar_select %p259, %s256, 7
      %s261 = smul.addr %s258, 8
      %s262 = sadd.s32 %s260, %s261
      %s263 = smul.addr %s262, 4
      %s264 = scalar_lea.vmem %s0, %s263
      %s265 = sadd.s32 %s21, %s23
      %s266 = smul.u32 8, %s265
      %p267 = scmp.lt.s32.totalorder %s21, 0
      %s268 = scalar_select %p267, %s21, 0
      %p269 = scmp.lt.s32.totalorder %s22, 1
      %s270 = scalar_select %p269, %s22, 1
      %s271 = smul.addr %s270, 10
      %s272 = smul.addr %s268, 20
      %s273 = sadd.s32 %s271, %s272
      %s274 = scalar_lea.vmem %s5, %s273
      %p276 = scmp.eq.s32.totalorder %s23, 0
      // Predicated region
      $region41: #{roof_cnn_forward.1} parent=39 // pred_check
        %p277 = pneg %p276
      $region42: #{roof_cnn_forward.1} parent=39 // pred_check_branch
        %279 = sbr.rel (%p277) target = $region44
      $region43: #{roof_cnn_forward.1} parent=39 // pred_region
        %280 = vst [vmem:[#allocation2] sm:$0xff] 0.0
        %281 = vst [vmem:[#allocation2 + $0x8] sm:$0xff] 0.0
        %282 = vst [vmem:[#allocation2 + $0x10] sm:$0xff] 0.0
        %283 = vst [vmem:[#allocation2 + $0x18] sm:$0xff] 0.0
        %284 = vst [vmem:[#allocation2 + $0x20] sm:$0xff] 0.0
        %285 = vst [vmem:[#allocation2 + $0x28] sm:$0xff] 0.0
        %286 = vst [vmem:[#allocation2 + $0x30] sm:$0xff] 0.0
        %287 = vst [vmem:[#allocation2 + $0x38] sm:$0xff] 0.0
        %288 = vst [vmem:[#allocation2 + $0x40] sm:$0xff] 0.0
        %289 = vst [vmem:[#allocation2 + $0x48] sm:$0xff] 0.0
      $region44: #{roof_cnn_forward.1} parent=39 // pred_fallthru
        _
      %v290 = vld [vmem:[%s264] sm:$0xf]
      %v291 = vld [vmem:[%s264 + $0x4] sm:$0xf]
      %v292 = vld [vmem:[%s264 + $0x8] sm:$0xf]
      %v293 = vld [vmem:[%s264 + $0xc] sm:$0xf]
      %v294 = vld [vmem:[%s264 + $0x10] sm:$0xf]
      %v295 = vld [vmem:[%s264 + $0x14] sm:$0xf]
      %v296 = vld [vmem:[%s264 + $0x18] sm:$0xf]
      %v297 = vld [vmem:[%s264 + $0x1c] sm:$0xf]
      %v298 = vld [vmem:[%s1] sm:$0xf]
      %v299 = vld [vmem:[%s1 + $0x4] sm:$0xf]
      %v300 = vld [vmem:[%s1 + $0x8] sm:$0xf]
      %v301 = vld [vmem:[%s1 + $0xc] sm:$0x3]
      %v302 = vld [vmem:[%s2] sm:$0x1]
      %v304 = vlaneseq
      %v305 = vshrl.u32 %v304, 7
      %v306 = vsub.s32 0, %v305
      %v307 = vrot.slane %v302, %v306
      %v317 = vunpack.c.l.b16 %v290
      %v318 = vunpack.c.l.b16 %v291
      %v319 = vunpack.c.l.b16 %v292
      %v320 = vunpack.c.l.b16 %v293
      %v321 = vunpack.c.l.b16 %v294
      %v322 = vunpack.c.l.b16 %v295
      %v323 = vunpack.c.l.b16 %v296
      %v324 = vunpack.c.l.b16 %v297
      %v325 = vpack.c.b16 %v318, %v317
      %v326 = vpack.c.b16 %v320, %v319
      %v327 = vpack.c.b16 %v322, %v321
      %v328 = vpack.c.b16 %v324, %v323
      %v333 = vunpack.c.l.b16 %v298
      %v334 = vunpack.c.l.b16 %v299
      %v335 = vunpack.c.l.b16 %v300
      %v336 = vunpack.c.l.b16 %v301
      %v337 = vpack.c.b16 %v334, %v333
      %v338 = vpack.c.b16 %v336, %v335
      %vm340 = vcmask 220160
      %v342 = vsel %vm340, %v325, 0
      %v345 = vsel %vm340, %v326, 0
      %v348 = vsel %vm340, %v327, 0
      %v351 = vsel %vm340, %v328, 0
      %vm353 = vcmask 1044480
      %vm354 = vcmask 1045504
      %v355 = vsel %vm353, 4294967295, 65535
      %v356 = vsel %vm354, %v355, 0
      %v358 = vand.u32 %v338, %v356
      %360 = vmatprep.subr.bf16.mxu0 0
      %361 = vmatpush1.bf16.msra.mxu0 %v337
      %362 = vmatprep.subr.bf16.mxu0 0
      %363 = vmatpush1.bf16.msra.mxu0 %v358
      %364 = vmatprep.subr.bf16.mxu0 0
      %365 = vmatpush1.bf16.msra.mxu0 0
      %366 = vmatprep.subr.bf16.mxu0 0
      %367 = vmatpush1.bf16.msra.mxu0 0
      %368 = vmatprep.subr.bf16.mxu0 0
      %369 = vmatpush1.bf16.msra.mxu0 0
      %370 = vmatprep.subr.bf16.mxu0 0
      %371 = vmatpush1.bf16.msra.mxu0 0
      %372 = vmatprep.subr.bf16.mxu0 0
      %373 = vmatpush1.bf16.msra.mxu0 0
      %374 = vmatprep.subr.bf16.mxu0 0
      %375 = vmatpush1.bf16.msra.mxu0 0
      %376 = vmatprep.subr.bf16.mxu0 0
      %377 = vmatpush1.bf16.msra.mxu0 0
      %378 = vmatprep.subr.bf16.mxu0 0
      %379 = vmatpush1.bf16.msra.mxu0 0
      %380 = vmatprep.subr.bf16.mxu0 0
      %381 = vmatpush1.bf16.msra.mxu0 0
      %382 = vmatprep.subr.bf16.mxu0 0
      %383 = vmatpush1.bf16.msra.mxu0 0
      %384 = vmatprep.subr.bf16.mxu0 0
      %385 = vmatpush1.bf16.msra.mxu0 0
      %386 = vmatprep.subr.bf16.mxu0 0
      %387 = vmatpush1.bf16.msra.mxu0 0
      %388 = vmatprep.subr.bf16.mxu0 0
      %389 = vmatpush1.bf16.msra.mxu0 0
      %390 = vmatprep.subr.bf16.mxu0 0
      %391 = vmatpush1.bf16.msra.mxu0 0
      %392 = vmatprep.mubr.bf16.mxu0 0
      %393 = vmatmul.mubr.bf16.gmra.mrb[0].mxu0 %v342
      %v394 = vpop.f32.mrb[0].mxu0
      %v395 = vadd.f32 %v307, %v394
      %v396 = vpop.f32.mrb[0].mxu0
      %v397 = vpop.f32.mrb[0].mxu0
      %v398 = vadd.f32 %v307, %v397
      %v399 = vpop.f32.mrb[0].mxu0
      %400 = vmatprep.mubr.bf16.mxu0 0
      %401 = vmatmul.mubr.bf16.gmra.mrb[0].mxu0 %v345
      %v402 = vpop.f32.mrb[0].mxu0
      %v403 = vadd.f32 %v307, %v402
      %v404 = vpop.f32.mrb[0].mxu0
      %v405 = vpop.f32.mrb[0].mxu0
      %v406 = vadd.f32 %v307, %v405
      %v407 = vpop.f32.mrb[0].mxu0
      %408 = vmatprep.mubr.bf16.mxu0 0
      %409 = vmatmul.mubr.bf16.gmra.mrb[0].mxu0 %v348
      %v410 = vpop.f32.mrb[0].mxu0
      %v411 = vadd.f32 %v307, %v410
      %v412 = vpop.f32.mrb[0].mxu0
      %v413 = vpop.f32.mrb[0].mxu0
      %v414 = vadd.f32 %v307, %v413
      %v415 = vpop.f32.mrb[0].mxu0
      %416 = vmatprep.mubr.bf16.mxu0 0
      %417 = vmatmul.mubr.bf16.gmra.mrb[0].mxu0 %v351
      %v418 = vpop.f32.mrb[0].mxu0
      %v419 = vadd.f32 %v307, %v418
      %v420 = vpop.f32.mrb[0].mxu0
      %v421 = vpop.f32.mrb[0].mxu0
      %v422 = vadd.f32 %v307, %v421
      %v423 = vpop.f32.mrb[0].mxu0
      %424 = vdwg.mxu0
      %v425 = vmax.f32 %v395, 0.0
      %v426 = vmax.f32 %v398, 0.0
      %v427 = vmax.f32 %v403, 0.0
      %v428 = vmax.f32 %v406, 0.0
      %v429 = vmax.f32 %v411, 0.0
      %v430 = vmax.f32 %v414, 0.0
      %v431 = vmax.f32 %v419, 0.0
      %v432 = vmax.f32 %v422, 0.0
      %v433 = vmin.f32 %v425, 6.0
      %v434 = vmin.f32 %v426, 6.0
      %v435 = vmin.f32 %v427, 6.0
      %v436 = vmin.f32 %v428, 6.0
      %v437 = vmin.f32 %v429, 6.0
      %v438 = vmin.f32 %v430, 6.0
      %v439 = vmin.f32 %v431, 6.0
      %v440 = vmin.f32 %v432, 6.0
      %v441 = vpack.c.bf16 %v434, %v433
      %v442 = vpack.c.bf16 %v436, %v435
      %v443 = vpack.c.bf16 %v438, %v437
      %v444 = vpack.c.bf16 %v440, %v439
      %v445 = vld [vmem:[%s3] sm:$0xff]
      %v446 = vld [vmem:[%s3 + $0x28] sm:$0xff]
      %v447 = vld [vmem:[%s3 + $0x50] sm:$0xff]
      %v448 = vld [vmem:[%s3 + $0x78] sm:$0xff]
      %v449 = vld [vmem:[%s3 + $0xa0] sm:$0xff]
      %v450 = vld [vmem:[%s3 + $0xc8] sm:$0xff]
      %v451 = vld [vmem:[%s3 + $0xf0] sm:$0xff]
      %v452 = vld [vmem:[%s3 + $0x118] sm:$0xff]
      %v453 = vld [vmem:[%s3 + $0x140] sm:$0xff]
      %v454 = vld [vmem:[%s3 + $0x168] sm:$0xff]
      %v455 = vld [vmem:[%s3 + $0x190] sm:$0xff]
      %v456 = vld [vmem:[%s3 + $0x1b8] sm:$0xff]
      %v457 = vld [vmem:[%s3 + $0x1e0] sm:$0xff]
      %v458 = vld [vmem:[%s3 + $0x208] sm:$0xff]
      %v459 = vld [vmem:[%s3 + $0x230] sm:$0xff]
      %v460 = vld [vmem:[%s3 + $0x258] sm:$0xff]
      %v461 = vld [vmem:[%s4] sm:$0x3]
      %v463 = vlaneseq
      %v464 = vshrl.u32 %v463, 7
      %v465 = vsub.s32 0, %v464
      %v466 = vrot.slane %v461, %v465
      %v467 = vlaneseq
      %v468 = vshrl.u32 %v467, 7
      %v469 = vsub.s32 1, %v468
      %v470 = vrot.slane %v461, %v469
      %v489 = vunpack.c.l.b16 %v445
      %v490 = vunpack.c.h.b16 %v445
      %v491 = vunpack.c.l.b16 %v446
      %v492 = vunpack.c.h.b16 %v446
      %v493 = vunpack.c.l.b16 %v447
      %v494 = vunpack.c.h.b16 %v447
      %v495 = vunpack.c.l.b16 %v448
      %v496 = vunpack.c.h.b16 %v448
      %v497 = vunpack.c.l.b16 %v449
      %v498 = vunpack.c.h.b16 %v449
      %v499 = vunpack.c.l.b16 %v450
      %v500 = vunpack.c.h.b16 %v450
      %v501 = vunpack.c.l.b16 %v451
      %v502 = vunpack.c.h.b16 %v451
      %v503 = vunpack.c.l.b16 %v452
      %v504 = vunpack.c.h.b16 %v452
      %v505 = vunpack.c.l.b16 %v453
      %v506 = vunpack.c.h.b16 %v453
      %v507 = vunpack.c.l.b16 %v454
      %v508 = vunpack.c.h.b16 %v454
      %v509 = vunpack.c.l.b16 %v455
      %v510 = vunpack.c.h.b16 %v455
      %v511 = vunpack.c.l.b16 %v456
      %v512 = vunpack.c.h.b16 %v456
      %v513 = vunpack.c.l.b16 %v457
      %v514 = vunpack.c.h.b16 %v457
      %v515 = vunpack.c.l.b16 %v458
      %v516 = vunpack.c.h.b16 %v458
      %v517 = vunpack.c.l.b16 %v459
      %v518 = vunpack.c.h.b16 %v459
      %v519 = vunpack.c.l.b16 %v460
      %v520 = vunpack.c.h.b16 %v460
      %v521 = vpack.c.b16 %v491, %v489
      %v522 = vpack.c.b16 %v492, %v490
      %v523 = vpack.c.b16 %v495, %v493
      %v524 = vpack.c.b16 %v496, %v494
      %v525 = vpack.c.b16 %v499, %v497
      %v526 = vpack.c.b16 %v500, %v498
      %v527 = vpack.c.b16 %v503, %v501
      %v528 = vpack.c.b16 %v504, %v502
      %v529 = vpack.c.b16 %v507, %v505
      %v530 = vpack.c.b16 %v508, %v506
      %v531 = vpack.c.b16 %v511, %v509
      %v532 = vpack.c.b16 %v512, %v510
      %v533 = vpack.c.b16 %v515, %v513
      %v534 = vpack.c.b16 %v516, %v514
      %v535 = vpack.c.b16 %v519, %v517
      %v536 = vpack.c.b16 %v520, %v518
      %553 = vmatprep.subr.bf16.mxu0 %v522
      %554 = vmatpush1.bf16.msra.mxu0 %v521
      %555 = vmatprep.subr.bf16.mxu0 %v524
      %556 = vmatpush1.bf16.msra.mxu0 %v523
      %557 = vmatprep.subr.bf16.mxu0 %v526
      %558 = vmatpush1.bf16.msra.mxu0 %v525
      %559 = vmatprep.subr.bf16.mxu0 %v528
      %560 = vmatpush1.bf16.msra.mxu0 %v527
      %561 = vmatprep.subr.bf16.mxu0 %v530
      %562 = vmatpush1.bf16.msra.mxu0 %v529
      %563 = vmatprep.subr.bf16.mxu0 %v532
      %564 = vmatpush1.bf16.msra.mxu0 %v531
      %565 = vmatprep.subr.bf16.mxu0 %v534
      %566 = vmatpush1.bf16.msra.mxu0 %v533
      %567 = vmatprep.subr.bf16.mxu0 %v536
      %568 = vmatpush1.bf16.msra.mxu0 %v535
      %569 = vmatprep.subr.bf16.mxu0 0
      %570 = vmatpush1.bf16.msra.mxu0 0
      %571 = vmatprep.subr.bf16.mxu0 0
      %572 = vmatpush1.bf16.msra.mxu0 0
      %573 = vmatprep.subr.bf16.mxu0 0
      %574 = vmatpush1.bf16.msra.mxu0 0
      %575 = vmatprep.subr.bf16.mxu0 0
      %576 = vmatpush1.bf16.msra.mxu0 0
      %577 = vmatprep.subr.bf16.mxu0 0
      %578 = vmatpush1.bf16.msra.mxu0 0
      %579 = vmatprep.subr.bf16.mxu0 0
      %580 = vmatpush1.bf16.msra.mxu0 0
      %581 = vmatprep.subr.bf16.mxu0 0
      %582 = vmatpush1.bf16.msra.mxu0 0
      %583 = vmatprep.subr.bf16.mxu0 0
      %584 = vmatpush1.bf16.msra.mxu0 0
      %585 = vmatprep.mubr.bf16.mxu0 0
      %586 = vmatmul.mubr.bf16.gmra.mrb[0].mxu0 %v441
      %v587 = vpop.f32.mrb[0].mxu0
      %v588 = vadd.f32 %v466, %v587
      %v589 = vpop.f32.mrb[0].mxu0
      %v590 = vadd.f32 %v470, %v589
      %v591 = vpop.f32.mrb[0].mxu0
      %v592 = vadd.f32 %v466, %v591
      %v593 = vpop.f32.mrb[0].mxu0
      %v594 = vadd.f32 %v470, %v593
      %595 = vmatprep.mubr.bf16.mxu0 0
      %596 = vmatmul.mubr.bf16.gmra.mrb[0].mxu0 %v442
      %v597 = vpop.f32.mrb[0].mxu0
      %v598 = vadd.f32 %v466, %v597
      %v599 = vpop.f32.mrb[0].mxu0
      %v600 = vadd.f32 %v470, %v599
      %v601 = vpop.f32.mrb[0].mxu0
      %v602 = vadd.f32 %v466, %v601
      %v603 = vpop.f32.mrb[0].mxu0
      %v604 = vadd.f32 %v470, %v603
      %605 = vmatprep.mubr.bf16.mxu0 0
      %606 = vmatmul.mubr.bf16.gmra.mrb[0].mxu0 %v443
      %v607 = vpop.f32.mrb[0].mxu0
      %v608 = vadd.f32 %v466, %v607
      %v609 = vpop.f32.mrb[0].mxu0
      %v610 = vadd.f32 %v470, %v609
      %v611 = vpop.f32.mrb[0].mxu0
      %v612 = vadd.f32 %v466, %v611
      %v613 = vpop.f32.mrb[0].mxu0
      %v614 = vadd.f32 %v470, %v613
      %615 = vmatprep.mubr.bf16.mxu0 0
      %616 = vmatmul.mubr.bf16.gmra.mrb[0].mxu0 %v444
      %v617 = vpop.f32.mrb[0].mxu0
      %v618 = vadd.f32 %v466, %v617
      %v619 = vpop.f32.mrb[0].mxu0
      %v620 = vadd.f32 %v470, %v619
      %v621 = vpop.f32.mrb[0].mxu0
      %v622 = vadd.f32 %v466, %v621
      %v623 = vpop.f32.mrb[0].mxu0
      %v624 = vadd.f32 %v470, %v623
      %625 = vdwg.mxu0
      %v626 = vmax.f32 %v588, 0.0
      %v627 = vmax.f32 %v590, 0.0
      %v628 = vmax.f32 %v592, 0.0
      %v629 = vmax.f32 %v594, 0.0
      %v630 = vmax.f32 %v598, 0.0
      %v631 = vmax.f32 %v600, 0.0
      %v632 = vmax.f32 %v602, 0.0
      %v633 = vmax.f32 %v604, 0.0
      %v634 = vmax.f32 %v608, 0.0
      %v635 = vmax.f32 %v610, 0.0
      %v636 = vmax.f32 %v612, 0.0
      %v637 = vmax.f32 %v614, 0.0
      %v638 = vmax.f32 %v618, 0.0
      %v639 = vmax.f32 %v620, 0.0
      %v640 = vmax.f32 %v622, 0.0
      %v641 = vmax.f32 %v624, 0.0
      %v642 = vmin.f32 %v626, 6.0
      %v643 = vmin.f32 %v627, 6.0
      %v644 = vmin.f32 %v628, 6.0
      %v645 = vmin.f32 %v629, 6.0
      %v646 = vmin.f32 %v630, 6.0
      %v647 = vmin.f32 %v631, 6.0
      %v648 = vmin.f32 %v632, 6.0
      %v649 = vmin.f32 %v633, 6.0
      %v650 = vmin.f32 %v634, 6.0
      %v651 = vmin.f32 %v635, 6.0
      %v652 = vmin.f32 %v636, 6.0
      %v653 = vmin.f32 %v637, 6.0
      %v654 = vmin.f32 %v638, 6.0
      %v655 = vmin.f32 %v639, 6.0
      %v656 = vmin.f32 %v640, 6.0
      %v657 = vmin.f32 %v641, 6.0
      %v658 = vadd.f32 %v642, %v644
      %v659 = vadd.f32 %v658, %v646
      %v660 = vadd.f32 %v659, %v648
      %v661 = vadd.f32 %v660, %v650
      %v662 = vadd.f32 %v661, %v652
      %v663 = vadd.f32 %v662, %v654
      %v664 = vadd.f32 %v663, %v656
      %v665 = vadd.f32 %v643, %v645
      %v666 = vadd.f32 %v665, %v647
      %v667 = vadd.f32 %v666, %v649
      %v668 = vadd.f32 %v667, %v651
      %v669 = vadd.f32 %v668, %v653
      %v670 = vadd.f32 %v669, %v655
      %v671 = vadd.f32 %v670, %v657
      %v672 = vld [vmem:[#allocation2] sm:$0xff]
      %v673 = vld [vmem:[#allocation2 + $0x8] sm:$0xff]
      %v674 = vadd.f32 %v672, %v664
      %v675 = vadd.f32 %v673, %v671
      %676 = vst [vmem:[#allocation2] sm:$0xff] %v674
      %677 = vst [vmem:[#allocation2 + $0x8] sm:$0xff] %v675
      %v678 = vld [vmem:[%s3 + $0x8] sm:$0xff]
      %v679 = vld [vmem:[%s3 + $0x30] sm:$0xff]
      %v680 = vld [vmem:[%s3 + $0x58] sm:$0xff]
      %v681 = vld [vmem:[%s3 + $0x80] sm:$0xff]
      %v682 = vld [vmem:[%s3 + $0xa8] sm:$0xff]
      %v683 = vld [vmem:[%s3 + $0xd0] sm:$0xff]
      %v684 = vld [vmem:[%s3 + $0xf8] sm:$0xff]
      %v685 = vld [vmem:[%s3 + $0x120] sm:$0xff]
      %v686 = vld [vmem:[%s3 + $0x148] sm:$0xff]
      %v687 = vld [vmem:[%s3 + $0x170] sm:$0xff]
      %v688 = vld [vmem:[%s3 + $0x198] sm:$0xff]
      %v689 = vld [vmem:[%s3 + $0x1c0] sm:$0xff]
      %v690 = vld [vmem:[%s3 + $0x1e8] sm:$0xff]
      %v691 = vld [vmem:[%s3 + $0x210] sm:$0xff]
      %v692 = vld [vmem:[%s3 + $0x238] sm:$0xff]
      %v693 = vld [vmem:[%s3 + $0x260] sm:$0xff]
      %v694 = vld [vmem:[%s4 + $0x2] sm:$0x3]
      %v696 = vlaneseq
      %v697 = vshrl.u32 %v696, 7
      %v698 = vsub.s32 0, %v697
      %v699 = vrot.slane %v694, %v698
      %v700 = vlaneseq
      %v701 = vshrl.u32 %v700, 7
      %v702 = vsub.s32 1, %v701
      %v703 = vrot.slane %v694, %v702
      %v722 = vunpack.c.l.b16 %v678
      %v723 = vunpack.c.h.b16 %v678
      %v724 = vunpack.c.l.b16 %v679
      %v725 = vunpack.c.h.b16 %v679
      %v726 = vunpack.c.l.b16 %v680
      %v727 = vunpack.c.h.b16 %v680
      %v728 = vunpack.c.l.b16 %v681
      %v729 = vunpack.c.h.b16 %v681
      %v730 = vunpack.c.l.b16 %v682
      %v731 = vunpack.c.h.b16 %v682
      %v732 = vunpack.c.l.b16 %v683
      %v733 = vunpack.c.h.b16 %v683
      %v734 = vunpack.c.l.b16 %v684
      %v735 = vunpack.c.h.b16 %v684
      %v736 = vunpack.c.l.b16 %v685
      %v737 = vunpack.c.h.b16 %v685
      %v738 = vunpack.c.l.b16 %v686
      %v739 = vunpack.c.h.b16 %v686
      %v740 = vunpack.c.l.b16 %v687
      %v741 = vunpack.c.h.b16 %v687
      %v742 = vunpack.c.l.b16 %v688
      %v743 = vunpack.c.h.b16 %v688
      %v744 = vunpack.c.l.b16 %v689
      %v745 = vunpack.c.h.b16 %v689
      %v746 = vunpack.c.l.b16 %v690
      %v747 = vunpack.c.h.b16 %v690
      %v748 = vunpack.c.l.b16 %v691
      %v749 = vunpack.c.h.b16 %v691
      %v750 = vunpack.c.l.b16 %v692
      %v751 = vunpack.c.h.b16 %v692
      %v752 = vunpack.c.l.b16 %v693
      %v753 = vunpack.c.h.b16 %v693
      %v754 = vpack.c.b16 %v724, %v722
      %v755 = vpack.c.b16 %v725, %v723
      %v756 = vpack.c.b16 %v728, %v726
      %v757 = vpack.c.b16 %v729, %v727
      %v758 = vpack.c.b16 %v732, %v730
      %v759 = vpack.c.b16 %v733, %v731
      %v760 = vpack.c.b16 %v736, %v734
      %v761 = vpack.c.b16 %v737, %v735
      %v762 = vpack.c.b16 %v740, %v738
      %v763 = vpack.c.b16 %v741, %v739
      %v764 = vpack.c.b16 %v744, %v742
      %v765 = vpack.c.b16 %v745, %v743
      %v766 = vpack.c.b16 %v748, %v746
      %v767 = vpack.c.b16 %v749, %v747
      %v768 = vpack.c.b16 %v752, %v750
      %v769 = vpack.c.b16 %v753, %v751
      %786 = vmatprep.subr.bf16.mxu0 %v755
      %787 = vmatpush1.bf16.msra.mxu0 %v754
      %788 = vmatprep.subr.bf16.mxu0 %v757
      %789 = vmatpush1.bf16.msra.mxu0 %v756
      %790 = vmatprep.subr.bf16.mxu0 %v759
      %791 = vmatpush1.bf16.msra.mxu0 %v758
      %792 = vmatprep.subr.bf16.mxu0 %v761
      %793 = vmatpush1.bf16.msra.mxu0 %v760
      %794 = vmatprep.subr.bf16.mxu0 %v763
      %795 = vmatpush1.bf16.msra.mxu0 %v762
      %796 = vmatprep.subr.bf16.mxu0 %v765
      %797 = vmatpush1.bf16.msra.mxu0 %v764
      %798 = vmatprep.subr.bf16.mxu0 %v767
      %799 = vmatpush1.bf16.msra.mxu0 %v766
      %800 = vmatprep.subr.bf16.mxu0 %v769
      %801 = vmatpush1.bf16.msra.mxu0 %v768
      %802 = vmatprep.subr.bf16.mxu0 0
      %803 = vmatpush1.bf16.msra.mxu0 0
      %804 = vmatprep.subr.bf16.mxu0 0
      %805 = vmatpush1.bf16.msra.mxu0 0
      %806 = vmatprep.subr.bf16.mxu0 0
      %807 = vmatpush1.bf16.msra.mxu0 0
      %808 = vmatprep.subr.bf16.mxu0 0
      %809 = vmatpush1.bf16.msra.mxu0 0
      %810 = vmatprep.subr.bf16.mxu0 0
      %811 = vmatpush1.bf16.msra.mxu0 0
      %812 = vmatprep.subr.bf16.mxu0 0
      %813 = vmatpush1.bf16.msra.mxu0 0
      %814 = vmatprep.subr.bf16.mxu0 0
      %815 = vmatpush1.bf16.msra.mxu0 0
      %816 = vmatprep.subr.bf16.mxu0 0
      %817 = vmatpush1.bf16.msra.mxu0 0
      %818 = vmatprep.mubr.bf16.mxu0 0
      %819 = vmatmul.mubr.bf16.gmra.mrb[0].mxu0 %v441
      %v820 = vpop.f32.mrb[0].mxu0
      %v821 = vadd.f32 %v699, %v820
      %v822 = vpop.f32.mrb[0].mxu0
      %v823 = vadd.f32 %v703, %v822
      %v824 = vpop.f32.mrb[0].mxu0
      %v825 = vadd.f32 %v699, %v824
      %v826 = vpop.f32.mrb[0].mxu0
      %v827 = vadd.f32 %v703, %v826
      %828 = vmatprep.mubr.bf16.mxu0 0
      %829 = vmatmul.mubr.bf16.gmra.mrb[0].mxu0 %v442
      %v830 = vpop.f32.mrb[0].mxu0
      %v831 = vadd.f32 %v699, %v830
      %v832 = vpop.f32.mrb[0].mxu0
      %v833 = vadd.f32 %v703, %v832
      %v834 = vpop.f32.mrb[0].mxu0
      %v835 = vadd.f32 %v699, %v834
      %v836 = vpop.f32.mrb[0].mxu0
      %v837 = vadd.f32 %v703, %v836
      %838 = vmatprep.mubr.bf16.mxu0 0
      %839 = vmatmul.mubr.bf16.gmra.mrb[0].mxu0 %v443
      %v840 = vpop.f32.mrb[0].mxu0
      %v841 = vadd.f32 %v699, %v840
      %v842 = vpop.f32.mrb[0].mxu0
      %v843 = vadd.f32 %v703, %v842
      %v844 = vpop.f32.mrb[0].mxu0
      %v845 = vadd.f32 %v699, %v844
      %v846 = vpop.f32.mrb[0].mxu0
      %v847 = vadd.f32 %v703, %v846
      %848 = vmatprep.mubr.bf16.mxu0 0
      %849 = vmatmul.mubr.bf16.gmra.mrb[0].mxu0 %v444
      %v850 = vpop.f32.mrb[0].mxu0
      %v851 = vadd.f32 %v699, %v850
      %v852 = vpop.f32.mrb[0].mxu0
      %v853 = vadd.f32 %v703, %v852
      %v854 = vpop.f32.mrb[0].mxu0
      %v855 = vadd.f32 %v699, %v854
      %v856 = vpop.f32.mrb[0].mxu0
      %v857 = vadd.f32 %v703, %v856
      %858 = vdwg.mxu0
      %v859 = vmax.f32 %v821, 0.0
      %v860 = vmax.f32 %v823, 0.0
      %v861 = vmax.f32 %v825, 0.0
      %v862 = vmax.f32 %v827, 0.0
      %v863 = vmax.f32 %v831, 0.0
      %v864 = vmax.f32 %v833, 0.0
      %v865 = vmax.f32 %v835, 0.0
      %v866 = vmax.f32 %v837, 0.0
      %v867 = vmax.f32 %v841, 0.0
      %v868 = vmax.f32 %v843, 0.0
      %v869 = vmax.f32 %v845, 0.0
      %v870 = vmax.f32 %v847, 0.0
      %v871 = vmax.f32 %v851, 0.0
      %v872 = vmax.f32 %v853, 0.0
      %v873 = vmax.f32 %v855, 0.0
      %v874 = vmax.f32 %v857, 0.0
      %v875 = vmin.f32 %v859, 6.0
      %v876 = vmin.f32 %v860, 6.0
      %v877 = vmin.f32 %v861, 6.0
      %v878 = vmin.f32 %v862, 6.0
      %v879 = vmin.f32 %v863, 6.0
      %v880 = vmin.f32 %v864, 6.0
      %v881 = vmin.f32 %v865, 6.0
      %v882 = vmin.f32 %v866, 6.0
      %v883 = vmin.f32 %v867, 6.0
      %v884 = vmin.f32 %v868, 6.0
      %v885 = vmin.f32 %v869, 6.0
      %v886 = vmin.f32 %v870, 6.0
      %v887 = vmin.f32 %v871, 6.0
      %v888 = vmin.f32 %v872, 6.0
      %v889 = vmin.f32 %v873, 6.0
      %v890 = vmin.f32 %v874, 6.0
      %v891 = vadd.f32 %v875, %v877
      %v892 = vadd.f32 %v891, %v879
      %v893 = vadd.f32 %v892, %v881
      %v894 = vadd.f32 %v893, %v883
      %v895 = vadd.f32 %v894, %v885
      %v896 = vadd.f32 %v895, %v887
      %v897 = vadd.f32 %v896, %v889
      %v898 = vadd.f32 %v876, %v878
      %v899 = vadd.f32 %v898, %v880
      %v900 = vadd.f32 %v899, %v882
      %v901 = vadd.f32 %v900, %v884
      %v902 = vadd.f32 %v901, %v886
      %v903 = vadd.f32 %v902, %v888
      %v904 = vadd.f32 %v903, %v890
      %v905 = vld [vmem:[#allocation2 + $0x10] sm:$0xff]
      %v906 = vld [vmem:[#allocation2 + $0x18] sm:$0xff]
      %v907 = vadd.f32 %v905, %v897
      %v908 = vadd.f32 %v906, %v904
      %909 = vst [vmem:[#allocation2 + $0x10] sm:$0xff] %v907
      %910 = vst [vmem:[#allocation2 + $0x18] sm:$0xff] %v908
      %v911 = vld [vmem:[%s3 + $0x10] sm:$0xff]
      %v912 = vld [vmem:[%s3 + $0x38] sm:$0xff]
      %v913 = vld [vmem:[%s3 + $0x60] sm:$0xff]
      %v914 = vld [vmem:[%s3 + $0x88] sm:$0xff]
      %v915 = vld [vmem:[%s3 + $0xb0] sm:$0xff]
      %v916 = vld [vmem:[%s3 + $0xd8] sm:$0xff]
      %v917 = vld [vmem:[%s3 + $0x100] sm:$0xff]
      %v918 = vld [vmem:[%s3 + $0x128] sm:$0xff]
      %v919 = vld [vmem:[%s3 + $0x150] sm:$0xff]
      %v920 = vld [vmem:[%s3 + $0x178] sm:$0xff]
      %v921 = vld [vmem:[%s3 + $0x1a0] sm:$0xff]
      %v922 = vld [vmem:[%s3 + $0x1c8] sm:$0xff]
      %v923 = vld [vmem:[%s3 + $0x1f0] sm:$0xff]
      %v924 = vld [vmem:[%s3 + $0x218] sm:$0xff]
      %v925 = vld [vmem:[%s3 + $0x240] sm:$0xff]
      %v926 = vld [vmem:[%s3 + $0x268] sm:$0xff]
      %v927 = vld [vmem:[%s4 + $0x4] sm:$0x3]
      %v929 = vlaneseq
      %v930 = vshrl.u32 %v929, 7
      %v931 = vsub.s32 0, %v930
      %v932 = vrot.slane %v927, %v931
      %v933 = vlaneseq
      %v934 = vshrl.u32 %v933, 7
      %v935 = vsub.s32 1, %v934
      %v936 = vrot.slane %v927, %v935
      %v955 = vunpack.c.l.b16 %v911
      %v956 = vunpack.c.h.b16 %v911
      %v957 = vunpack.c.l.b16 %v912
      %v958 = vunpack.c.h.b16 %v912
      %v959 = vunpack.c.l.b16 %v913
      %v960 = vunpack.c.h.b16 %v913
      %v961 = vunpack.c.l.b16 %v914
      %v962 = vunpack.c.h.b16 %v914
      %v963 = vunpack.c.l.b16 %v915
      %v964 = vunpack.c.h.b16 %v915
      %v965 = vunpack.c.l.b16 %v916
      %v966 = vunpack.c.h.b16 %v916
      %v967 = vunpack.c.l.b16 %v917
      %v968 = vunpack.c.h.b16 %v917
      %v969 = vunpack.c.l.b16 %v918
      %v970 = vunpack.c.h.b16 %v918
      %v971 = vunpack.c.l.b16 %v919
      %v972 = vunpack.c.h.b16 %v919
      %v973 = vunpack.c.l.b16 %v920
      %v974 = vunpack.c.h.b16 %v920
      %v975 = vunpack.c.l.b16 %v921
      %v976 = vunpack.c.h.b16 %v921
      %v977 = vunpack.c.l.b16 %v922
      %v978 = vunpack.c.h.b16 %v922
      %v979 = vunpack.c.l.b16 %v923
      %v980 = vunpack.c.h.b16 %v923
      %v981 = vunpack.c.l.b16 %v924
      %v982 = vunpack.c.h.b16 %v924
      %v983 = vunpack.c.l.b16 %v925
      %v984 = vunpack.c.h.b16 %v925
      %v985 = vunpack.c.l.b16 %v926
      %v986 = vunpack.c.h.b16 %v926
      %v987 = vpack.c.b16 %v957, %v955
      %v988 = vpack.c.b16 %v958, %v956
      %v989 = vpack.c.b16 %v961, %v959
      %v990 = vpack.c.b16 %v962, %v960
      %v991 = vpack.c.b16 %v965, %v963
      %v992 = vpack.c.b16 %v966, %v964
      %v993 = vpack.c.b16 %v969, %v967
      %v994 = vpack.c.b16 %v970, %v968
      %v995 = vpack.c.b16 %v973, %v971
      %v996 = vpack.c.b16 %v974, %v972
      %v997 = vpack.c.b16 %v977, %v975
      %v998 = vpack.c.b16 %v978, %v976
      %v999 = vpack.c.b16 %v981, %v979
      %v1000 = vpack.c.b16 %v982, %v980
      %v1001 = vpack.c.b16 %v985, %v983
      %v1002 = vpack.c.b16 %v986, %v984
      %1019 = vmatprep.subr.bf16.mxu0 %v988
      %1020 = vmatpush1.bf16.msra.mxu0 %v987
      %1021 = vmatprep.subr.bf16.mxu0 %v990
      %1022 = vmatpush1.bf16.msra.mxu0 %v989
      %1023 = vmatprep.subr.bf16.mxu0 %v992
      %1024 = vmatpush1.bf16.msra.mxu0 %v991
      %1025 = vmatprep.subr.bf16.mxu0 %v994
      %1026 = vmatpush1.bf16.msra.mxu0 %v993
      %1027 = vmatprep.subr.bf16.mxu0 %v996
      %1028 = vmatpush1.bf16.msra.mxu0 %v995
      %1029 = vmatprep.subr.bf16.mxu0 %v998
      %1030 = vmatpush1.bf16.msra.mxu0 %v997
      %1031 = vmatprep.subr.bf16.mxu0 %v1000
      %1032 = vmatpush1.bf16.msra.mxu0 %v999
      %1033 = vmatprep.subr.bf16.mxu0 %v1002
      %1034 = vmatpush1.bf16.msra.mxu0 %v1001
      %1035 = vmatprep.subr.bf16.mxu0 0
      %1036 = vmatpush1.bf16.msra.mxu0 0
      %1037 = vmatprep.subr.bf16.mxu0 0
      %1038 = vmatpush1.bf16.msra.mxu0 0
      %1039 = vmatprep.subr.bf16.mxu0 0
      %1040 = vmatpush1.bf16.msra.mxu0 0
      %1041 = vmatprep.subr.bf16.mxu0 0
      %1042 = vmatpush1.bf16.msra.mxu0 0
      %1043 = vmatprep.subr.bf16.mxu0 0
      %1044 = vmatpush1.bf16.msra.mxu0 0
      %1045 = vmatprep.subr.bf16.mxu0 0
      %1046 = vmatpush1.bf16.msra.mxu0 0
      %1047 = vmatprep.subr.bf16.mxu0 0
      %1048 = vmatpush1.bf16.msra.mxu0 0
      %1049 = vmatprep.subr.bf16.mxu0 0
      %1050 = vmatpush1.bf16.msra.mxu0 0
      %1051 = vmatprep.mubr.bf16.mxu0 0
      %1052 = vmatmul.mubr.bf16.gmra.mrb[0].mxu0 %v441
      %v1053 = vpop.f32.mrb[0].mxu0
      %v1054 = vadd.f32 %v932, %v1053
      %v1055 = vpop.f32.mrb[0].mxu0
      %v1056 = vadd.f32 %v936, %v1055
      %v1057 = vpop.f32.mrb[0].mxu0
      %v1058 = vadd.f32 %v932, %v1057
      %v1059 = vpop.f32.mrb[0].mxu0
      %v1060 = vadd.f32 %v936, %v1059
      %1061 = vmatprep.mubr.bf16.mxu0 0
      %1062 = vmatmul.mubr.bf16.gmra.mrb[0].mxu0 %v442
      %v1063 = vpop.f32.mrb[0].mxu0
      %v1064 = vadd.f32 %v932, %v1063
      %v1065 = vpop.f32.mrb[0].mxu0
      %v1066 = vadd.f32 %v936, %v1065
      %v1067 = vpop.f32.mrb[0].mxu0
      %v1068 = vadd.f32 %v932, %v1067
      %v1069 = vpop.f32.mrb[0].mxu0
      %v1070 = vadd.f32 %v936, %v1069
      %1071 = vmatprep.mubr.bf16.mxu0 0
      %1072 = vmatmul.mubr.bf16.gmra.mrb[0].mxu0 %v443
      %v1073 = vpop.f32.mrb[0].mxu0
      %v1074 = vadd.f32 %v932, %v1073
      %v1075 = vpop.f32.mrb[0].mxu0
      %v1076 = vadd.f32 %v936, %v1075
      %v1077 = vpop.f32.mrb[0].mxu0
      %v1078 = vadd.f32 %v932, %v1077
      %v1079 = vpop.f32.mrb[0].mxu0
      %v1080 = vadd.f32 %v936, %v1079
      %1081 = vmatprep.mubr.bf16.mxu0 0
      %1082 = vmatmul.mubr.bf16.gmra.mrb[0].mxu0 %v444
      %v1083 = vpop.f32.mrb[0].mxu0
      %v1084 = vadd.f32 %v932, %v1083
      %v1085 = vpop.f32.mrb[0].mxu0
      %v1086 = vadd.f32 %v936, %v1085
      %v1087 = vpop.f32.mrb[0].mxu0
      %v1088 = vadd.f32 %v932, %v1087
      %v1089 = vpop.f32.mrb[0].mxu0
      %v1090 = vadd.f32 %v936, %v1089
      %1091 = vdwg.mxu0
      %v1092 = vmax.f32 %v1054, 0.0
      %v1093 = vmax.f32 %v1056, 0.0
      %v1094 = vmax.f32 %v1058, 0.0
      %v1095 = vmax.f32 %v1060, 0.0
      %v1096 = vmax.f32 %v1064, 0.0
      %v1097 = vmax.f32 %v1066, 0.0
      %v1098 = vmax.f32 %v1068, 0.0
      %v1099 = vmax.f32 %v1070, 0.0
      %v1100 = vmax.f32 %v1074, 0.0
      %v1101 = vmax.f32 %v1076, 0.0
      %v1102 = vmax.f32 %v1078, 0.0
      %v1103 = vmax.f32 %v1080, 0.0
      %v1104 = vmax.f32 %v1084, 0.0
      %v1105 = vmax.f32 %v1086, 0.0
      %v1106 = vmax.f32 %v1088, 0.0
      %v1107 = vmax.f32 %v1090, 0.0
      %v1108 = vmin.f32 %v1092, 6.0
      %v1109 = vmin.f32 %v1093, 6.0
      %v1110 = vmin.f32 %v1094, 6.0
      %v1111 = vmin.f32 %v1095, 6.0
      %v1112 = vmin.f32 %v1096, 6.0
      %v1113 = vmin.f32 %v1097, 6.0
      %v1114 = vmin.f32 %v1098, 6.0
      %v1115 = vmin.f32 %v1099, 6.0
      %v1116 = vmin.f32 %v1100, 6.0
      %v1117 = vmin.f32 %v1101, 6.0
      %v1118 = vmin.f32 %v1102, 6.0
      %v1119 = vmin.f32 %v1103, 6.0
      %v1120 = vmin.f32 %v1104, 6.0
      %v1121 = vmin.f32 %v1105, 6.0
      %v1122 = vmin.f32 %v1106, 6.0
      %v1123 = vmin.f32 %v1107, 6.0
      %v1124 = vadd.f32 %v1108, %v1110
      %v1125 = vadd.f32 %v1124, %v1112
      %v1126 = vadd.f32 %v1125, %v1114
      %v1127 = vadd.f32 %v1126, %v1116
      %v1128 = vadd.f32 %v1127, %v1118
      %v1129 = vadd.f32 %v1128, %v1120
      %v1130 = vadd.f32 %v1129, %v1122
      %v1131 = vadd.f32 %v1109, %v1111
      %v1132 = vadd.f32 %v1131, %v1113
      %v1133 = vadd.f32 %v1132, %v1115
      %v1134 = vadd.f32 %v1133, %v1117
      %v1135 = vadd.f32 %v1134, %v1119
      %v1136 = vadd.f32 %v1135, %v1121
      %v1137 = vadd.f32 %v1136, %v1123
      %v1138 = vld [vmem:[#allocation2 + $0x20] sm:$0xff]
      %v1139 = vld [vmem:[#allocation2 + $0x28] sm:$0xff]
      %v1140 = vadd.f32 %v1138, %v1130
      %v1141 = vadd.f32 %v1139, %v1137
      %1142 = vst [vmem:[#allocation2 + $0x20] sm:$0xff] %v1140
      %1143 = vst [vmem:[#allocation2 + $0x28] sm:$0xff] %v1141
      %v1144 = vld [vmem:[%s3 + $0x18] sm:$0xff]
      %v1145 = vld [vmem:[%s3 + $0x40] sm:$0xff]
      %v1146 = vld [vmem:[%s3 + $0x68] sm:$0xff]
      %v1147 = vld [vmem:[%s3 + $0x90] sm:$0xff]
      %v1148 = vld [vmem:[%s3 + $0xb8] sm:$0xff]
      %v1149 = vld [vmem:[%s3 + $0xe0] sm:$0xff]
      %v1150 = vld [vmem:[%s3 + $0x108] sm:$0xff]
      %v1151 = vld [vmem:[%s3 + $0x130] sm:$0xff]
      %v1152 = vld [vmem:[%s3 + $0x158] sm:$0xff]
      %v1153 = vld [vmem:[%s3 + $0x180] sm:$0xff]
      %v1154 = vld [vmem:[%s3 + $0x1a8] sm:$0xff]
      %v1155 = vld [vmem:[%s3 + $0x1d0] sm:$0xff]
      %v1156 = vld [vmem:[%s3 + $0x1f8] sm:$0xff]
      %v1157 = vld [vmem:[%s3 + $0x220] sm:$0xff]
      %v1158 = vld [vmem:[%s3 + $0x248] sm:$0xff]
      %v1159 = vld [vmem:[%s3 + $0x270] sm:$0xff]
      %v1160 = vld [vmem:[%s4 + $0x6] sm:$0x3]
      %v1162 = vlaneseq
      %v1163 = vshrl.u32 %v1162, 7
      %v1164 = vsub.s32 0, %v1163
      %v1165 = vrot.slane %v1160, %v1164
      %v1166 = vlaneseq
      %v1167 = vshrl.u32 %v1166, 7
      %v1168 = vsub.s32 1, %v1167
      %v1169 = vrot.slane %v1160, %v1168
      %v1188 = vunpack.c.l.b16 %v1144
      %v1189 = vunpack.c.h.b16 %v1144
      %v1190 = vunpack.c.l.b16 %v1145
      %v1191 = vunpack.c.h.b16 %v1145
      %v1192 = vunpack.c.l.b16 %v1146
      %v1193 = vunpack.c.h.b16 %v1146
      %v1194 = vunpack.c.l.b16 %v1147
      %v1195 = vunpack.c.h.b16 %v1147
      %v1196 = vunpack.c.l.b16 %v1148
      %v1197 = vunpack.c.h.b16 %v1148
      %v1198 = vunpack.c.l.b16 %v1149
      %v1199 = vunpack.c.h.b16 %v1149
      %v1200 = vunpack.c.l.b16 %v1150
      %v1201 = vunpack.c.h.b16 %v1150
      %v1202 = vunpack.c.l.b16 %v1151
      %v1203 = vunpack.c.h.b16 %v1151
      %v1204 = vunpack.c.l.b16 %v1152
      %v1205 = vunpack.c.h.b16 %v1152
      %v1206 = vunpack.c.l.b16 %v1153
      %v1207 = vunpack.c.h.b16 %v1153
      %v1208 = vunpack.c.l.b16 %v1154
      %v1209 = vunpack.c.h.b16 %v1154
      %v1210 = vunpack.c.l.b16 %v1155
      %v1211 = vunpack.c.h.b16 %v1155
      %v1212 = vunpack.c.l.b16 %v1156
      %v1213 = vunpack.c.h.b16 %v1156
      %v1214 = vunpack.c.l.b16 %v1157
      %v1215 = vunpack.c.h.b16 %v1157
      %v1216 = vunpack.c.l.b16 %v1158
      %v1217 = vunpack.c.h.b16 %v1158
      %v1218 = vunpack.c.l.b16 %v1159
      %v1219 = vunpack.c.h.b16 %v1159
      %v1220 = vpack.c.b16 %v1190, %v1188
      %v1221 = vpack.c.b16 %v1191, %v1189
      %v1222 = vpack.c.b16 %v1194, %v1192
      %v1223 = vpack.c.b16 %v1195, %v1193
      %v1224 = vpack.c.b16 %v1198, %v1196
      %v1225 = vpack.c.b16 %v1199, %v1197
      %v1226 = vpack.c.b16 %v1202, %v1200
      %v1227 = vpack.c.b16 %v1203, %v1201
      %v1228 = vpack.c.b16 %v1206, %v1204
      %v1229 = vpack.c.b16 %v1207, %v1205
      %v1230 = vpack.c.b16 %v1210, %v1208
      %v1231 = vpack.c.b16 %v1211, %v1209
      %v1232 = vpack.c.b16 %v1214, %v1212
      %v1233 = vpack.c.b16 %v1215, %v1213
      %v1234 = vpack.c.b16 %v1218, %v1216
      %v1235 = vpack.c.b16 %v1219, %v1217
      %1252 = vmatprep.subr.bf16.mxu0 %v1221
      %1253 = vmatpush1.bf16.msra.mxu0 %v1220
      %1254 = vmatprep.subr.bf16.mxu0 %v1223
      %1255 = vmatpush1.bf16.msra.mxu0 %v1222
      %1256 = vmatprep.subr.bf16.mxu0 %v1225
      %1257 = vmatpush1.bf16.msra.mxu0 %v1224
      %1258 = vmatprep.subr.bf16.mxu0 %v1227
      %1259 = vmatpush1.bf16.msra.mxu0 %v1226
      %1260 = vmatprep.subr.bf16.mxu0 %v1229
      %1261 = vmatpush1.bf16.msra.mxu0 %v1228
      %1262 = vmatprep.subr.bf16.mxu0 %v1231
      %1263 = vmatpush1.bf16.msra.mxu0 %v1230
      %1264 = vmatprep.subr.bf16.mxu0 %v1233
      %1265 = vmatpush1.bf16.msra.mxu0 %v1232
      %1266 = vmatprep.subr.bf16.mxu0 %v1235
      %1267 = vmatpush1.bf16.msra.mxu0 %v1234
      %1268 = vmatprep.subr.bf16.mxu0 0
      %1269 = vmatpush1.bf16.msra.mxu0 0
      %1270 = vmatprep.subr.bf16.mxu0 0
      %1271 = vmatpush1.bf16.msra.mxu0 0
      %1272 = vmatprep.subr.bf16.mxu0 0
      %1273 = vmatpush1.bf16.msra.mxu0 0
      %1274 = vmatprep.subr.bf16.mxu0 0
      %1275 = vmatpush1.bf16.msra.mxu0 0
      %1276 = vmatprep.subr.bf16.mxu0 0
      %1277 = vmatpush1.bf16.msra.mxu0 0
      %1278 = vmatprep.subr.bf16.mxu0 0
      %1279 = vmatpush1.bf16.msra.mxu0 0
      %1280 = vmatprep.subr.bf16.mxu0 0
      %1281 = vmatpush1.bf16.msra.mxu0 0
      %1282 = vmatprep.subr.bf16.mxu0 0
      %1283 = vmatpush1.bf16.msra.mxu0 0
      %1284 = vmatprep.mubr.bf16.mxu0 0
      %1285 = vmatmul.mubr.bf16.gmra.mrb[0].mxu0 %v441
      %v1286 = vpop.f32.mrb[0].mxu0
      %v1287 = vadd.f32 %v1165, %v1286
      %v1288 = vpop.f32.mrb[0].mxu0
      %v1289 = vadd.f32 %v1169, %v1288
      %v1290 = vpop.f32.mrb[0].mxu0
      %v1291 = vadd.f32 %v1165, %v1290
      %v1292 = vpop.f32.mrb[0].mxu0
      %v1293 = vadd.f32 %v1169, %v1292
      %1294 = vmatprep.mubr.bf16.mxu0 0
      %1295 = vmatmul.mubr.bf16.gmra.mrb[0].mxu0 %v442
      %v1296 = vpop.f32.mrb[0].mxu0
      %v1297 = vadd.f32 %v1165, %v1296
      %v1298 = vpop.f32.mrb[0].mxu0
      %v1299 = vadd.f32 %v1169, %v1298
      %v1300 = vpop.f32.mrb[0].mxu0
      %v1301 = vadd.f32 %v1165, %v1300
      %v1302 = vpop.f32.mrb[0].mxu0
      %v1303 = vadd.f32 %v1169, %v1302
      %1304 = vmatprep.mubr.bf16.mxu0 0
      %1305 = vmatmul.mubr.bf16.gmra.mrb[0].mxu0 %v443
      %v1306 = vpop.f32.mrb[0].mxu0
      %v1307 = vadd.f32 %v1165, %v1306
      %v1308 = vpop.f32.mrb[0].mxu0
      %v1309 = vadd.f32 %v1169, %v1308
      %v1310 = vpop.f32.mrb[0].mxu0
      %v1311 = vadd.f32 %v1165, %v1310
      %v1312 = vpop.f32.mrb[0].mxu0
      %v1313 = vadd.f32 %v1169, %v1312
      %1314 = vmatprep.mubr.bf16.mxu0 0
      %1315 = vmatmul.mubr.bf16.gmra.mrb[0].mxu0 %v444
      %v1316 = vpop.f32.mrb[0].mxu0
      %v1317 = vadd.f32 %v1165, %v1316
      %v1318 = vpop.f32.mrb[0].mxu0
      %v1319 = vadd.f32 %v1169, %v1318
      %v1320 = vpop.f32.mrb[0].mxu0
      %v1321 = vadd.f32 %v1165, %v1320
      %v1322 = vpop.f32.mrb[0].mxu0
      %v1323 = vadd.f32 %v1169, %v1322
      %1324 = vdwg.mxu0
      %v1325 = vmax.f32 %v1287, 0.0
      %v1326 = vmax.f32 %v1289, 0.0
      %v1327 = vmax.f32 %v1291, 0.0
      %v1328 = vmax.f32 %v1293, 0.0
      %v1329 = vmax.f32 %v1297, 0.0
      %v1330 = vmax.f32 %v1299, 0.0
      %v1331 = vmax.f32 %v1301, 0.0
      %v1332 = vmax.f32 %v1303, 0.0
      %v1333 = vmax.f32 %v1307, 0.0
      %v1334 = vmax.f32 %v1309, 0.0
      %v1335 = vmax.f32 %v1311, 0.0
      %v1336 = vmax.f32 %v1313, 0.0
      %v1337 = vmax.f32 %v1317, 0.0
      %v1338 = vmax.f32 %v1319, 0.0
      %v1339 = vmax.f32 %v1321, 0.0
      %v1340 = vmax.f32 %v1323, 0.0
      %v1341 = vmin.f32 %v1325, 6.0
      %v1342 = vmin.f32 %v1326, 6.0
      %v1343 = vmin.f32 %v1327, 6.0
      %v1344 = vmin.f32 %v1328, 6.0
      %v1345 = vmin.f32 %v1329, 6.0
      %v1346 = vmin.f32 %v1330, 6.0
      %v1347 = vmin.f32 %v1331, 6.0
      %v1348 = vmin.f32 %v1332, 6.0
      %v1349 = vmin.f32 %v1333, 6.0
      %v1350 = vmin.f32 %v1334, 6.0
      %v1351 = vmin.f32 %v1335, 6.0
      %v1352 = vmin.f32 %v1336, 6.0
      %v1353 = vmin.f32 %v1337, 6.0
      %v1354 = vmin.f32 %v1338, 6.0
      %v1355 = vmin.f32 %v1339, 6.0
      %v1356 = vmin.f32 %v1340, 6.0
      %v1357 = vadd.f32 %v1341, %v1343
      %v1358 = vadd.f32 %v1357, %v1345
      %v1359 = vadd.f32 %v1358, %v1347
      %v1360 = vadd.f32 %v1359, %v1349
      %v1361 = vadd.f32 %v1360, %v1351
      %v1362 = vadd.f32 %v1361, %v1353
      %v1363 = vadd.f32 %v1362, %v1355
      %v1364 = vadd.f32 %v1342, %v1344
      %v1365 = vadd.f32 %v1364, %v1346
      %v1366 = vadd.f32 %v1365, %v1348
      %v1367 = vadd.f32 %v1366, %v1350
      %v1368 = vadd.f32 %v1367, %v1352
      %v1369 = vadd.f32 %v1368, %v1354
      %v1370 = vadd.f32 %v1369, %v1356
      %v1371 = vld [vmem:[#allocation2 + $0x30] sm:$0xff]
      %v1372 = vld [vmem:[#allocation2 + $0x38] sm:$0xff]
      %v1373 = vadd.f32 %v1371, %v1363
      %v1374 = vadd.f32 %v1372, %v1370
      %1375 = vst [vmem:[#allocation2 + $0x30] sm:$0xff] %v1373
      %1376 = vst [vmem:[#allocation2 + $0x38] sm:$0xff] %v1374
      %v1377 = vld [vmem:[%s3 + $0x20] sm:$0xff]
      %v1378 = vld [vmem:[%s3 + $0x48] sm:$0xff]
      %v1379 = vld [vmem:[%s3 + $0x70] sm:$0xff]
      %v1380 = vld [vmem:[%s3 + $0x98] sm:$0xff]
      %v1381 = vld [vmem:[%s3 + $0xc0] sm:$0xff]
      %v1382 = vld [vmem:[%s3 + $0xe8] sm:$0xff]
      %v1383 = vld [vmem:[%s3 + $0x110] sm:$0xff]
      %v1384 = vld [vmem:[%s3 + $0x138] sm:$0xff]
      %v1385 = vld [vmem:[%s3 + $0x160] sm:$0xff]
      %v1386 = vld [vmem:[%s3 + $0x188] sm:$0xff]
      %v1387 = vld [vmem:[%s3 + $0x1b0] sm:$0xff]
      %v1388 = vld [vmem:[%s3 + $0x1d8] sm:$0xff]
      %v1389 = vld [vmem:[%s3 + $0x200] sm:$0xff]
      %v1390 = vld [vmem:[%s3 + $0x228] sm:$0xff]
      %v1391 = vld [vmem:[%s3 + $0x250] sm:$0xff]
      %v1392 = vld [vmem:[%s3 + $0x278] sm:$0xff]
      %v1393 = vld [vmem:[%s4 + $0x8] sm:$0x3]
      %v1395 = vlaneseq
      %v1396 = vshrl.u32 %v1395, 7
      %v1397 = vsub.s32 0, %v1396
      %v1398 = vrot.slane %v1393, %v1397
      %v1399 = vlaneseq
      %v1400 = vshrl.u32 %v1399, 7
      %v1401 = vsub.s32 1, %v1400
      %v1402 = vrot.slane %v1393, %v1401
      %v1421 = vunpack.c.l.b16 %v1377
      %v1422 = vunpack.c.h.b16 %v1377
      %v1423 = vunpack.c.l.b16 %v1378
      %v1424 = vunpack.c.h.b16 %v1378
      %v1425 = vunpack.c.l.b16 %v1379
      %v1426 = vunpack.c.h.b16 %v1379
      %v1427 = vunpack.c.l.b16 %v1380
      %v1428 = vunpack.c.h.b16 %v1380
      %v1429 = vunpack.c.l.b16 %v1381
      %v1430 = vunpack.c.h.b16 %v1381
      %v1431 = vunpack.c.l.b16 %v1382
      %v1432 = vunpack.c.h.b16 %v1382
      %v1433 = vunpack.c.l.b16 %v1383
      %v1434 = vunpack.c.h.b16 %v1383
      %v1435 = vunpack.c.l.b16 %v1384
      %v1436 = vunpack.c.h.b16 %v1384
      %v1437 = vunpack.c.l.b16 %v1385
      %v1438 = vunpack.c.h.b16 %v1385
      %v1439 = vunpack.c.l.b16 %v1386
      %v1440 = vunpack.c.h.b16 %v1386
      %v1441 = vunpack.c.l.b16 %v1387
      %v1442 = vunpack.c.h.b16 %v1387
      %v1443 = vunpack.c.l.b16 %v1388
      %v1444 = vunpack.c.h.b16 %v1388
      %v1445 = vunpack.c.l.b16 %v1389
      %v1446 = vunpack.c.h.b16 %v1389
      %v1447 = vunpack.c.l.b16 %v1390
      %v1448 = vunpack.c.h.b16 %v1390
      %v1449 = vunpack.c.l.b16 %v1391
      %v1450 = vunpack.c.h.b16 %v1391
      %v1451 = vunpack.c.l.b16 %v1392
      %v1452 = vunpack.c.h.b16 %v1392
      %v1453 = vpack.c.b16 %v1423, %v1421
      %v1454 = vpack.c.b16 %v1424, %v1422
      %v1455 = vpack.c.b16 %v1427, %v1425
      %v1456 = vpack.c.b16 %v1428, %v1426
      %v1457 = vpack.c.b16 %v1431, %v1429
      %v1458 = vpack.c.b16 %v1432, %v1430
      %v1459 = vpack.c.b16 %v1435, %v1433
      %v1460 = vpack.c.b16 %v1436, %v1434
      %v1461 = vpack.c.b16 %v1439, %v1437
      %v1462 = vpack.c.b16 %v1440, %v1438
      %v1463 = vpack.c.b16 %v1443, %v1441
      %v1464 = vpack.c.b16 %v1444, %v1442
      %v1465 = vpack.c.b16 %v1447, %v1445
      %v1466 = vpack.c.b16 %v1448, %v1446
      %v1467 = vpack.c.b16 %v1451, %v1449
      %v1468 = vpack.c.b16 %v1452, %v1450
      %1485 = vmatprep.subr.bf16.mxu0 %v1454
      %1486 = vmatpush1.bf16.msra.mxu0 %v1453
      %1487 = vmatprep.subr.bf16.mxu0 %v1456
      %1488 = vmatpush1.bf16.msra.mxu0 %v1455
      %1489 = vmatprep.subr.bf16.mxu0 %v1458
      %1490 = vmatpush1.bf16.msra.mxu0 %v1457
      %1491 = vmatprep.subr.bf16.mxu0 %v1460
      %1492 = vmatpush1.bf16.msra.mxu0 %v1459
      %1493 = vmatprep.subr.bf16.mxu0 %v1462
      %1494 = vmatpush1.bf16.msra.mxu0 %v1461
      %1495 = vmatprep.subr.bf16.mxu0 %v1464
      %1496 = vmatpush1.bf16.msra.mxu0 %v1463
      %1497 = vmatprep.subr.bf16.mxu0 %v1466
      %1498 = vmatpush1.bf16.msra.mxu0 %v1465
      %1499 = vmatprep.subr.bf16.mxu0 %v1468
      %1500 = vmatpush1.bf16.msra.mxu0 %v1467
      %1501 = vmatprep.subr.bf16.mxu0 0
      %1502 = vmatpush1.bf16.msra.mxu0 0
      %1503 = vmatprep.subr.bf16.mxu0 0
      %1504 = vmatpush1.bf16.msra.mxu0 0
      %1505 = vmatprep.subr.bf16.mxu0 0
      %1506 = vmatpush1.bf16.msra.mxu0 0
      %1507 = vmatprep.subr.bf16.mxu0 0
      %1508 = vmatpush1.bf16.msra.mxu0 0
      %1509 = vmatprep.subr.bf16.mxu0 0
      %1510 = vmatpush1.bf16.msra.mxu0 0
      %1511 = vmatprep.subr.bf16.mxu0 0
      %1512 = vmatpush1.bf16.msra.mxu0 0
      %1513 = vmatprep.subr.bf16.mxu0 0
      %1514 = vmatpush1.bf16.msra.mxu0 0
      %1515 = vmatprep.subr.bf16.mxu0 0
      %1516 = vmatpush1.bf16.msra.mxu0 0
      %1517 = vmatprep.mubr.bf16.mxu0 0
      %1518 = vmatmul.mubr.bf16.gmra.mrb[0].mxu0 %v441
      %v1519 = vpop.f32.mrb[0].mxu0
      %v1520 = vadd.f32 %v1398, %v1519
      %v1521 = vpop.f32.mrb[0].mxu0
      %v1522 = vadd.f32 %v1402, %v1521
      %v1523 = vpop.f32.mrb[0].mxu0
      %v1524 = vadd.f32 %v1398, %v1523
      %v1525 = vpop.f32.mrb[0].mxu0
      %v1526 = vadd.f32 %v1402, %v1525
      %1527 = vmatprep.mubr.bf16.mxu0 0
      %1528 = vmatmul.mubr.bf16.gmra.mrb[0].mxu0 %v442
      %v1529 = vpop.f32.mrb[0].mxu0
      %v1530 = vadd.f32 %v1398, %v1529
      %v1531 = vpop.f32.mrb[0].mxu0
      %v1532 = vadd.f32 %v1402, %v1531
      %v1533 = vpop.f32.mrb[0].mxu0
      %v1534 = vadd.f32 %v1398, %v1533
      %v1535 = vpop.f32.mrb[0].mxu0
      %v1536 = vadd.f32 %v1402, %v1535
      %1537 = vmatprep.mubr.bf16.mxu0 0
      %1538 = vmatmul.mubr.bf16.gmra.mrb[0].mxu0 %v443
      %v1539 = vpop.f32.mrb[0].mxu0
      %v1540 = vadd.f32 %v1398, %v1539
      %v1541 = vpop.f32.mrb[0].mxu0
      %v1542 = vadd.f32 %v1402, %v1541
      %v1543 = vpop.f32.mrb[0].mxu0
      %v1544 = vadd.f32 %v1398, %v1543
      %v1545 = vpop.f32.mrb[0].mxu0
      %v1546 = vadd.f32 %v1402, %v1545
      %1547 = vmatprep.mubr.bf16.mxu0 0
      %1548 = vmatmul.mubr.bf16.gmra.mrb[0].mxu0 %v444
      %v1549 = vpop.f32.mrb[0].mxu0
      %v1550 = vadd.f32 %v1398, %v1549
      %v1551 = vpop.f32.mrb[0].mxu0
      %v1552 = vadd.f32 %v1402, %v1551
      %v1553 = vpop.f32.mrb[0].mxu0
      %v1554 = vadd.f32 %v1398, %v1553
      %v1555 = vpop.f32.mrb[0].mxu0
      %v1556 = vadd.f32 %v1402, %v1555
      %1557 = vdwg.mxu0
      %v1558 = vmax.f32 %v1520, 0.0
      %v1559 = vmax.f32 %v1522, 0.0
      %v1560 = vmax.f32 %v1524, 0.0
      %v1561 = vmax.f32 %v1526, 0.0
      %v1562 = vmax.f32 %v1530, 0.0
      %v1563 = vmax.f32 %v1532, 0.0
      %v1564 = vmax.f32 %v1534, 0.0
      %v1565 = vmax.f32 %v1536, 0.0
      %v1566 = vmax.f32 %v1540, 0.0
      %v1567 = vmax.f32 %v1542, 0.0
      %v1568 = vmax.f32 %v1544, 0.0
      %v1569 = vmax.f32 %v1546, 0.0
      %v1570 = vmax.f32 %v1550, 0.0
      %v1571 = vmax.f32 %v1552, 0.0
      %v1572 = vmax.f32 %v1554, 0.0
      %v1573 = vmax.f32 %v1556, 0.0
      %v1574 = vmin.f32 %v1558, 6.0
      %v1575 = vmin.f32 %v1559, 6.0
      %v1576 = vmin.f32 %v1560, 6.0
      %v1577 = vmin.f32 %v1561, 6.0
      %v1578 = vmin.f32 %v1562, 6.0
      %v1579 = vmin.f32 %v1563, 6.0
      %v1580 = vmin.f32 %v1564, 6.0
      %v1581 = vmin.f32 %v1565, 6.0
      %v1582 = vmin.f32 %v1566, 6.0
      %v1583 = vmin.f32 %v1567, 6.0
      %v1584 = vmin.f32 %v1568, 6.0
      %v1585 = vmin.f32 %v1569, 6.0
      %v1586 = vmin.f32 %v1570, 6.0
      %v1587 = vmin.f32 %v1571, 6.0
      %v1588 = vmin.f32 %v1572, 6.0
      %v1589 = vmin.f32 %v1573, 6.0
      %v1590 = vadd.f32 %v1574, %v1576
      %v1591 = vadd.f32 %v1590, %v1578
      %v1592 = vadd.f32 %v1591, %v1580
      %v1593 = vadd.f32 %v1592, %v1582
      %v1594 = vadd.f32 %v1593, %v1584
      %v1595 = vadd.f32 %v1594, %v1586
      %v1596 = vadd.f32 %v1595, %v1588
      %v1597 = vadd.f32 %v1575, %v1577
      %v1598 = vadd.f32 %v1597, %v1579
      %v1599 = vadd.f32 %v1598, %v1581
      %v1600 = vadd.f32 %v1599, %v1583
      %v1601 = vadd.f32 %v1600, %v1585
      %v1602 = vadd.f32 %v1601, %v1587
      %v1603 = vadd.f32 %v1602, %v1589
      %v1604 = vld [vmem:[#allocation2 + $0x40] sm:$0xff]
      %v1605 = vld [vmem:[#allocation2 + $0x48] sm:$0xff]
      %v1606 = vadd.f32 %v1604, %v1596
      %v1607 = vadd.f32 %v1605, %v1603
      %1608 = vst [vmem:[#allocation2 + $0x40] sm:$0xff] %v1606
      %1609 = vst [vmem:[#allocation2 + $0x48] sm:$0xff] %v1607
      // Predicated region
      $region45: #{roof_cnn_forward.1} parent=39 // pred_check
        %p1610 = pneg %p276
      $region46: #{roof_cnn_forward.1} parent=39 // pred_check_branch
        %1612 = sbr.rel (%p1610) target = $region48
      $region47: #{roof_cnn_forward.1} parent=39 // pred_region
        %v1613 = vld [vmem:[#allocation2] sm:$0xff]
        %v1614 = vld [vmem:[#allocation2 + $0x8] sm:$0xff]
        %v1615 = vld [vmem:[#allocation2 + $0x10] sm:$0xff]
        %v1616 = vld [vmem:[#allocation2 + $0x18] sm:$0xff]
        %v1617 = vld [vmem:[#allocation2 + $0x20] sm:$0xff]
        %v1618 = vld [vmem:[#allocation2 + $0x28] sm:$0xff]
        %v1619 = vld [vmem:[#allocation2 + $0x30] sm:$0xff]
        %v1620 = vld [vmem:[#allocation2 + $0x38] sm:$0xff]
        %v1621 = vld [vmem:[#allocation2 + $0x40] sm:$0xff]
        %v1622 = vld [vmem:[#allocation2 + $0x48] sm:$0xff]
        %v1623 = vrot.slane %v1613, 4
        %v1624 = vadd.f32 %v1613, %v1623
        %v1625 = vrot.slane %v1624, 2
        %v1626 = vadd.f32 %v1624, %v1625
        %v1627 = vrot.slane %v1626, 1
        %v1628 = vadd.f32 %v1626, %v1627
        %v1629 = vrot.slane %v1614, 4
        %v1630 = vadd.f32 %v1614, %v1629
        %v1631 = vrot.slane %v1630, 2
        %v1632 = vadd.f32 %v1630, %v1631
        %v1633 = vrot.slane %v1632, 1
        %v1634 = vadd.f32 %v1632, %v1633
        %v1635 = vrot.slane %v1615, 4
        %v1636 = vadd.f32 %v1615, %v1635
        %v1637 = vrot.slane %v1636, 2
        %v1638 = vadd.f32 %v1636, %v1637
        %v1639 = vrot.slane %v1638, 1
        %v1640 = vadd.f32 %v1638, %v1639
        %v1641 = vrot.slane %v1616, 4
        %v1642 = vadd.f32 %v1616, %v1641
        %v1643 = vrot.slane %v1642, 2
        %v1644 = vadd.f32 %v1642, %v1643
        %v1645 = vrot.slane %v1644, 1
        %v1646 = vadd.f32 %v1644, %v1645
        %v1647 = vrot.slane %v1617, 4
        %v1648 = vadd.f32 %v1617, %v1647
        %v1649 = vrot.slane %v1648, 2
        %v1650 = vadd.f32 %v1648, %v1649
        %v1651 = vrot.slane %v1650, 1
        %v1652 = vadd.f32 %v1650, %v1651
        %v1653 = vrot.slane %v1618, 4
        %v1654 = vadd.f32 %v1618, %v1653
        %v1655 = vrot.slane %v1654, 2
        %v1656 = vadd.f32 %v1654, %v1655
        %v1657 = vrot.slane %v1656, 1
        %v1658 = vadd.f32 %v1656, %v1657
        %v1659 = vrot.slane %v1619, 4
        %v1660 = vadd.f32 %v1619, %v1659
        %v1661 = vrot.slane %v1660, 2
        %v1662 = vadd.f32 %v1660, %v1661
        %v1663 = vrot.slane %v1662, 1
        %v1664 = vadd.f32 %v1662, %v1663
        %v1665 = vrot.slane %v1620, 4
        %v1666 = vadd.f32 %v1620, %v1665
        %v1667 = vrot.slane %v1666, 2
        %v1668 = vadd.f32 %v1666, %v1667
        %v1669 = vrot.slane %v1668, 1
        %v1670 = vadd.f32 %v1668, %v1669
        %v1671 = vrot.slane %v1621, 4
        %v1672 = vadd.f32 %v1621, %v1671
        %v1673 = vrot.slane %v1672, 2
        %v1674 = vadd.f32 %v1672, %v1673
        %v1675 = vrot.slane %v1674, 1
        %v1676 = vadd.f32 %v1674, %v1675
        %v1677 = vrot.slane %v1622, 4
        %v1678 = vadd.f32 %v1622, %v1677
        %v1679 = vrot.slane %v1678, 2
        %v1680 = vadd.f32 %v1678, %v1679
        %v1681 = vrot.slane %v1680, 1
        %v1682 = vadd.f32 %v1680, %v1681
        %v1693 = vcombine.low %v1628, %v1634
        %v1694 = vcombine.low %v1640, %v1646
        %v1695 = vcombine.low %v1652, %v1658
        %v1696 = vcombine.low %v1664, %v1670
        %v1698 = vunpack.c.l.s4 1966171168
        %v1699 = vunpack.c.0.s8 %v1698
        %v1700 = vlaneseq
        %v1701 = vshrl.u32 %v1700, 7
        %v1702 = vsub.s32 %v1699, %v1701
        %v1703 = vrot.slane %v1693, %v1702
        %v1705 = vunpack.c.l.s4 1966171168
        %v1706 = vunpack.c.0.s8 %v1705
        %v1707 = vlaneseq
        %v1708 = vshrl.u32 %v1707, 7
        %v1709 = vsub.s32 %v1706, %v1708
        %v1710 = vrot.slane %v1694, %v1709
        %v1712 = vunpack.c.l.s4 1966171168
        %v1713 = vunpack.c.0.s8 %v1712
        %v1714 = vlaneseq
        %v1715 = vshrl.u32 %v1714, 7
        %v1716 = vsub.s32 %v1713, %v1715
        %v1717 = vrot.slane %v1695, %v1716
        %v1719 = vunpack.c.l.s4 1966171168
        %v1720 = vunpack.c.0.s8 %v1719
        %v1721 = vlaneseq
        %v1722 = vshrl.u32 %v1721, 7
        %v1723 = vsub.s32 %v1720, %v1722
        %v1724 = vrot.slane %v1696, %v1723
        %v1725 = vcombine.low %v1703, %v1710
        %v1726 = vcombine.low %v1717, %v1724
        %v1728 = vunpack.c.l.s4 1966171168
        %v1729 = vunpack.c.0.s8 %v1728
        %v1730 = vlaneseq
        %v1731 = vshrl.u32 %v1730, 7
        %v1732 = vsub.s32 %v1729, %v1731
        %v1733 = vrot.slane %v1725, %v1732
        %v1735 = vunpack.c.l.s4 1966171168
        %v1736 = vunpack.c.0.s8 %v1735
        %v1737 = vlaneseq
        %v1738 = vshrl.u32 %v1737, 7
        %v1739 = vsub.s32 %v1736, %v1738
        %v1740 = vrot.slane %v1726, %v1739
        %v1741 = vcombine.low %v1733, %v1740
        %v1742 = vcombine.low %v1676, %v1682
        %v1744 = vunpack.c.l.s4 1966171168
        %v1745 = vunpack.c.0.s8 %v1744
        %v1746 = vlaneseq
        %v1747 = vshrl.u32 %v1746, 7
        %v1748 = vsub.s32 %v1745, %v1747
        %v1749 = vrot.slane %v1742, %v1748
        %v1751 = vunpack.c.l.s4 1966171168
        %v1752 = vunpack.c.0.s8 %v1751
        %v1753 = vlaneseq
        %v1754 = vshrl.u32 %v1753, 7
        %v1755 = vsub.s32 %v1752, %v1754
        %v1756 = vrot.slane %v1749, %v1755
        %1759 = vst [vmem:[%s274] sm:$0xff] %v1741
        %v1760 = vlaneseq
        %vm1761 = vcmp.ge.s32.totalorder %v1760, 0
        %vm1762 = vcmp.lt.s32.totalorder %v1760, 256
        %vm1763 = vmand %vm1761, %vm1762
        %1764 = vst.msk [vmem:[%s274 + $0x8] sm:$0x3] %vm1763, %v1756
      $region48: #{roof_cnn_forward.1} parent=39 // pred_fallthru
        _
      %p1765 = scmp.lt.s32.totalorder %s21, 0
      %s1766 = scalar_select %p1765, %s21, 0
      %p1767 = scmp.lt.s32.totalorder %s22, 1
      %s1768 = scalar_select %p1767, %s22, 1
      %s1769 = smul.addr %s1768, 10
      %s1770 = smul.addr %s1766, 20
      %s1771 = sadd.s32 %s1769, %s1770
      %s1772 = scalar_lea.vmem %s5, %s1771
      // Predicated region
      $region49: #{roof_cnn_forward.1} parent=39 // pred_check
        %p1773 = pneg %p169
      $region50: #{roof_cnn_forward.1} parent=39 // pred_check_branch
        %1775 = sbr.rel (%p1773) target = $region52
      $region51: #{roof_cnn_forward.1} parent=39 // pred_region
        _
      $region52: #{roof_cnn_forward.1} parent=39 // pred_fallthru
        _
    $region40: #{roof_cnn_forward.1} parent=5 // pred_fallthru
      _
    %p1776 = scmp.le.s32.totalorder 2, %s11
    // Predicated region
    $region53: #{roof_cnn_forward.1} parent=5 // pred_check
      %p1777 = pneg %p1776
    $region54: #{roof_cnn_forward.1} parent=5 // pred_check_branch
      %1779 = sbr.rel (%p1777) target = $region56
    $region55: #{roof_cnn_forward.1} parent=5 // pred_region
      %s1780 = ssub.s32 %s11, 2
      // Predicated region
      $region57: #{roof_cnn_forward.1} parent=55 // pred_check
        %p1781 = pneg %p175
      $region58: #{roof_cnn_forward.1} parent=55 // pred_check_branch
        %1783 = sbr.rel (%p1781) target = $region60
      $region59: #{roof_cnn_forward.1} parent=55 // pred_region
        %p1784 = scmp.lt.s32.totalorder %s24, 0
        %s1785 = scalar_select %p1784, %s24, 0
        %p1786 = scmp.lt.s32.totalorder %s25, 1
        %s1787 = scalar_select %p1786, %s25, 1
        %s1788 = smul.addr %s1787, 10
        %s1789 = smul.addr %s1785, 20
        %s1790 = sadd.s32 %s1788, %s1789
        %s1791 = scalar_lea.vmem %s5, %s1790
      $region60: #{roof_cnn_forward.1} parent=55 // pred_fallthru
        _
    $region56: #{roof_cnn_forward.1} parent=5 // pred_fallthru
      _
  $region6: #{roof_cnn_forward.1} parent=0 // loop_footer
    %s15 = sadd.s32 1, %s11
  $region7: #{roof_cnn_forward.1} parent=0 // loop_footer_branch
    %10 = sbr.rel target = $region3
  $region8: #{roof_cnn_forward.1} parent=0 // loop_exit
    _

</llo_original>
